<compile_context>
chip_gen: v6e
topology: v6e:2x2x1
jax: 0.10.0
libtpu: 0.0.40
codegen_flags: <defaults>
</compile_context>

<pallas_src>
import math

import jax
import jax.numpy as jnp
import numpy as np
from jax.experimental import pallas as pl
from jax.experimental.pallas import tpu as pltpu

HIDDEN = 32   # hidden_size
LENGTH = 30   # sequence length implied by Linear(hidden_size * 30, 2)
KSIZE = 5
PAD = 2
NCLASS = 2


# ---------------------------------------------------------------------------
# Fused kernel: conv(+bias, banded matmul) -> sigmoid -> head linear
#               -> sigmoid -> 2-class log_softmax.  Batch on the lane axis.
# ---------------------------------------------------------------------------
def fused_cnn_kernel(x_ref, wconv_ref, wlin_ref, blin_ref, o_ref):
    # conv + bias + channel-major flatten in one matmul:
    #   (H*L, L+1) @ (L+1, TB) -> (H*L, TB), row index = h*L + l
    flat = jnp.dot(wconv_ref[...], x_ref[...],
                   preferred_element_type=jnp.float32)
    flat = jax.nn.sigmoid(flat)

    # head linear: (2, H*L) @ (H*L, TB) -> (2, TB)
    logits = jnp.dot(wlin_ref[...], flat,
                     preferred_element_type=jnp.float32) + blin_ref[...]
    s = jax.nn.sigmoid(logits)

    # 2-class log_softmax, purely lane-wise (no cross-lane/sublane reduction):
    #   lsm_0 = -softplus(s1 - s0),  lsm_1 = (s1 - s0) - softplus(s1 - s0)
    d = s[1:2, :] - s[0:1, :]
    sp = jnp.maximum(d, 0.0) + jnp.log(1.0 + jnp.exp(-jnp.abs(d)))
    o_ref[0:1, :] = -sp
    o_ref[1:2, :] = d - sp


# ---------------------------------------------------------------------------
# Wrapper: fold conv padding / im2col / bias / flatten into one weight matrix,
# transpose batch onto lanes, tile the batch over a "parallel" grid.
# ---------------------------------------------------------------------------
def _build_fused_conv_weight(w_conv, b_conv):
    """(H,1,K) conv weight + (H,) bias -> (H*L, L+1) matrix acting on [x; 1].

    Row h*L + l of the result reproduces conv output channel h at position l
    (with 'same' padding) plus its bias, i.e. exactly PyTorch's
    Conv1d(1,H,5,padding=2) followed by the channel-major flatten.
    """
    H = w_conv.shape[0]
    w = w_conv[:, 0, :]                                   # (H, K)
    l = jnp.arange(LENGTH)
    j = jnp.arange(LENGTH)
    k = j[None, :] - l[:, None] + PAD                     # (L, L) tap index
    valid = (k >= 0) & (k < KSIZE)
    kc = jnp.clip(k, 0, KSIZE - 1)
    band = jnp.where(valid[None, :, :], w[:, kc], 0.0)    # (H, L, L)
    w_band = band.reshape(H * LENGTH, LENGTH)             # row = h*L + l
    b_col = jnp.repeat(b_conv, LENGTH)[:, None]           # (H*L, 1)
    return jnp.concatenate([w_band, b_col], axis=1)       # (H*L, L+1)


def cnn_forward(x, params, *, batch_tile=256):
    """x: (B, 1, L) float32, NCW layout (same as PyTorch Conv1d input)."""
    B, C, L = x.shape
    assert C == 1 and L == LENGTH
    H = params["w_conv"].shape[0]
    HL = H * L

    # --- weight prep (tiny, once per call) --------------------------------
    w_aug = _build_fused_conv_weight(params["w_conv"], params["b_conv"])
    w_lin = params["w_lin"]                        # (2, H*L); cols = h*L + l
    b_lin = params["b_lin"].reshape(NCLASS, 1)     # (2, 1)

    # --- batch on lanes: x_t = [x; 1]^T, zero-padded to a tile multiple ----
    tb = batch_tile
    b_pad = ((B + tb - 1) // tb) * tb
    x2 = x[:, 0, :].astype(jnp.float32)                               # (B, L)
    x_t = jnp.concatenate([x2, jnp.ones((B, 1), jnp.float32)], axis=1).T
    x_t = jnp.pad(x_t, ((0, 0), (0, b_pad - B)))                      # (L+1, b_pad)

    out_t = pl.pallas_call(
        fused_cnn_kernel,
        out_shape=jax.ShapeDtypeStruct((NCLASS, b_pad), jnp.float32),
        grid_spec=pltpu.PrefetchScalarGridSpec(
            num_scalar_prefetch=0,
            grid=(b_pad // tb,),
            in_specs=[
                pl.BlockSpec((L + 1, tb), lambda i: (0, i)),    # x tile (lane-dense)
                pl.BlockSpec((HL, L + 1), lambda i: (0, 0)),    # fused conv weight
                pl.BlockSpec((NCLASS, HL), lambda i: (0, 0)),   # head weight
                pl.BlockSpec((NCLASS, 1), lambda i: (0, 0)),    # head bias
            ],
            out_specs=pl.BlockSpec((NCLASS, tb), lambda i: (0, i)),
        ),
        compiler_params=pltpu.CompilerParams(
            dimension_semantics=("parallel",)),
    )(x_t, w_aug, w_lin, b_lin)

    return out_t[:, :B].T                          # (B, 2)


# ---------------------------------------------------------------------------
# Params / reference
# ---------------------------------------------------------------------------
def init_params(key, hidden_size=HIDDEN):
    """Deterministic init mirroring PyTorch default uniform(-sqrt(k), sqrt(k))."""
    k1, k2, k3, k4 = jax.random.split(key, 4)
    bound_c = math.sqrt(1.0 / (1 * KSIZE))
    bound_l = math.sqrt(1.0 / (hidden_size * LENGTH))
    return {
        "w_conv": jax.random.uniform(k1, (hidden_size, 1, KSIZE), jnp.float32,
                                     -bound_c, bound_c),
        "b_conv": jax.random.uniform(k2, (hidden_size,), jnp.float32,
                                     -bound_c, bound_c),
        "w_lin": jax.random.uniform(k3, (NCLASS, hidden_size * LENGTH),
                                    jnp.float32, -bound_l, bound_l),
        "b_lin": jax.random.uniform(k4, (NCLASS,), jnp.float32,
                                    -bound_l, bound_l),
    }


def reference_forward(x, params):
    """Independent pure-JAX reference (uses lax.conv) for a correctness check."""
    z = jax.lax.conv_general_dilated(
        x, params["w_conv"], window_strides=(1,), padding=[(PAD, PAD)],
        dimension_numbers=("NCH", "OIH", "NCH"))
    z = z + params["b_conv"][None, :, None]
    s = jax.nn.sigmoid(z)                                       # (B, H, L)
    flat = s.reshape(s.shape[0], -1)                            # (B, H*L)
    logits = flat @ params["w_lin"].T + params["b_lin"]
    sg = jax.nn.sigmoid(logits)
    return jax.nn.log_softmax(sg, axis=1)


if __name__ == "__main__":
    key = jax.random.PRNGKey(0)
    k_param, k_x = jax.random.split(key)
    params = init_params(k_param, HIDDEN)

    B = 2
    x = jax.random.normal(k_x, (B, 1, LENGTH), dtype=jnp.float32)

    out = jax.jit(cnn_forward)(x, params)
    out = jax.block_until_ready(out)

    ref = reference_forward(x, params)
    np.testing.assert_allclose(np.asarray(out), np.asarray(ref),
                               rtol=1e-4, atol=1e-5)
    print("KERNEL_OK")
</pallas_src>

<mosaic_0001>
module attributes {stable_mosaic.version = 11 : i64} {
  func.func @fused_cnn_kernel(%arg0: i32, %arg1: memref<31x256xf32, #tpu.memory_space<vmem>>, %arg2: memref<960x31xf32, #tpu.memory_space<vmem>>, %arg3: memref<2x960xf32, #tpu.memory_space<vmem>>, %arg4: memref<2x1xf32, #tpu.memory_space<vmem>>, %arg5: memref<2x256xf32, #tpu.memory_space<vmem>>) attributes {dimension_semantics = [#tpu.dimension_semantics<parallel>], iteration_bounds = array<i64: 1>, scalar_prefetch = 0 : i64, scratch_operands = 0 : i64, tpu.core_type = #tpu.core_type<tc>, window_params = [{transform_indices = @transform_0, window_bounds = array<i64: 31, 256>}, {pipeline_mode = #tpu.pipeline_mode<synchronous>, transform_indices = @transform_1, window_bounds = array<i64: 960, 31>}, {pipeline_mode = #tpu.pipeline_mode<synchronous>, transform_indices = @transform_2, window_bounds = array<i64: 2, 960>}, {pipeline_mode = #tpu.pipeline_mode<synchronous>, transform_indices = @transform_3, window_bounds = array<i64: 2, 1>}, {transform_indices = @transform_4, window_bounds = array<i64: 2, 256>}]} {
    %c0 = arith.constant 0 : index
    %c0_0 = arith.constant 0 : index
    %0 = vector.load %arg2[%c0, %c0_0] : memref<960x31xf32, #tpu.memory_space<vmem>>, vector<960x31xf32>
    %c0_1 = arith.constant 0 : index
    %c0_2 = arith.constant 0 : index
    %1 = vector.load %arg1[%c0_1, %c0_2] : memref<31x256xf32, #tpu.memory_space<vmem>>, vector<31x256xf32>
    %cst = arith.constant dense<0.000000e+00> : vector<960x256xf32>
    %2 = tpu.matmul %0, %1, %cst {dimension_numbers = #tpu.dot_dimension_numbers<[1], [0], [0], [1], [0, 0, 1, 1], [], []>} : vector<960x31xf32>, vector<31x256xf32>, vector<960x256xf32> -> vector<960x256xf32>
    %3 = arith.negf %2 : vector<960x256xf32>
    %4 = math.exp %3 : vector<960x256xf32>
    %cst_3 = arith.constant 1.000000e+00 : f32
    %5 = vector.broadcast %cst_3 : f32 to vector<960x256xf32>
    %6 = arith.addf %5, %4 : vector<960x256xf32>
    %7 = arith.divf %5, %6 : vector<960x256xf32>
    %c0_4 = arith.constant 0 : index
    %c0_5 = arith.constant 0 : index
    %8 = vector.load %arg3[%c0_4, %c0_5] : memref<2x960xf32, #tpu.memory_space<vmem>>, vector<2x960xf32>
    %cst_6 = arith.constant dense<0.000000e+00> : vector<2x256xf32>
    %9 = tpu.matmul %8, %7, %cst_6 {dimension_numbers = #tpu.dot_dimension_numbers<[1], [0], [0], [1], [0, 0, 1, 1], [], []>} : vector<2x960xf32>, vector<960x256xf32>, vector<2x256xf32> -> vector<2x256xf32>
    %c0_7 = arith.constant 0 : index
    %c0_8 = arith.constant 0 : index
    %10 = vector.load %arg4[%c0_7, %c0_8] : memref<2x1xf32, #tpu.memory_space<vmem>>, vector<2x1xf32>
    %11 = vector.broadcast %10 : vector<2x1xf32> to vector<2x256xf32>
    %12 = arith.addf %9, %11 : vector<2x256xf32>
    %13 = arith.negf %12 : vector<2x256xf32>
    %14 = math.exp %13 : vector<2x256xf32>
    %cst_9 = arith.constant 1.000000e+00 : f32
    %15 = vector.broadcast %cst_9 : f32 to vector<2x256xf32>
    %16 = arith.addf %15, %14 : vector<2x256xf32>
    %17 = arith.divf %15, %16 : vector<2x256xf32>
    %18 = vector.extract_strided_slice %17 {offsets = [1, 0], sizes = [1, 256], strides = [1, 1]} : vector<2x256xf32> to vector<1x256xf32>
    %19 = vector.extract_strided_slice %17 {offsets = [0, 0], sizes = [1, 256], strides = [1, 1]} : vector<2x256xf32> to vector<1x256xf32>
    %20 = arith.subf %18, %19 : vector<1x256xf32>
    %cst_10 = arith.constant 0.000000e+00 : f32
    %21 = vector.broadcast %cst_10 : f32 to vector<1x256xf32>
    %22 = arith.maximumf %20, %21 : vector<1x256xf32>
    %23 = math.absf %20 : vector<1x256xf32>
    %cst_11 = arith.constant 0.000000e+00 : f32
    %24 = vector.broadcast %cst_11 : f32 to vector<1x256xf32>
    %25 = arith.subf %24, %23 : vector<1x256xf32>
    %26 = math.exp %25 : vector<1x256xf32>
    %cst_12 = arith.constant 1.000000e+00 : f32
    %27 = vector.broadcast %cst_12 : f32 to vector<1x256xf32>
    %28 = arith.addf %27, %26 : vector<1x256xf32>
    %29 = math.log %28 : vector<1x256xf32>
    %30 = arith.addf %22, %29 : vector<1x256xf32>
    %cst_13 = arith.constant 0.000000e+00 : f32
    %31 = vector.broadcast %cst_13 : f32 to vector<1x256xf32>
    %32 = arith.subf %31, %30 : vector<1x256xf32>
    %c0_14 = arith.constant 0 : index
    %c0_15 = arith.constant 0 : index
    %33 = vector.load %arg5[%c0_14, %c0_15] : memref<2x256xf32, #tpu.memory_space<vmem>>, vector<1x256xf32>
    tpu.vector_store %arg5[%c0_14, %c0_15], %32 {strides = array<i32>} : memref<2x256xf32, #tpu.memory_space<vmem>>, vector<1x256xf32>,
    %34 = arith.subf %20, %30 : vector<1x256xf32>
    %c1 = arith.constant 1 : index
    %c0_16 = arith.constant 0 : index
    %35 = vector.load %arg5[%c1, %c0_16] : memref<2x256xf32, #tpu.memory_space<vmem>>, vector<1x256xf32>
    tpu.vector_store %arg5[%c1, %c0_16], %34 {strides = array<i32>} : memref<2x256xf32, #tpu.memory_space<vmem>>, vector<1x256xf32>,
    return
  }
  func.func @transform_0(%arg0: i32) -> (i32, i32) {
    %c0_i32 = arith.constant 0 : i32
    %c0_i32_0 = arith.constant 0 : i32
    return %c0_i32, %arg0 : i32, i32
  }
  func.func @transform_1(%arg0: i32) -> (i32, i32) {
    %c0_i32 = arith.constant 0 : i32
    %c0_i32_0 = arith.constant 0 : i32
    %c0_i32_1 = arith.constant 0 : i32
    return %c0_i32, %c0_i32_0 : i32, i32
  }
  func.func @transform_2(%arg0: i32) -> (i32, i32) {
    %c0_i32 = arith.constant 0 : i32
    %c0_i32_0 = arith.constant 0 : i32
    %c0_i32_1 = arith.constant 0 : i32
    return %c0_i32, %c0_i32_0 : i32, i32
  }
  func.func @transform_3(%arg0: i32) -> (i32, i32) {
    %c0_i32 = arith.constant 0 : i32
    %c0_i32_0 = arith.constant 0 : i32
    %c0_i32_1 = arith.constant 0 : i32
    return %c0_i32, %c0_i32_0 : i32, i32
  }
  func.func @transform_4(%arg0: i32) -> (i32, i32) {
    %c0_i32 = arith.constant 0 : i32
    %c0_i32_0 = arith.constant 0 : i32
    return %c0_i32, %arg0 : i32, i32
  }
}

</mosaic_0001>

<llo_original>
// kernel: cnn_forward.1
$region0: #{cnn_forward.1}
  #allocation0 [shape = 'u32[]', space=smem, size = 0x4, offset = 0x4, fixed_abs, tag = 'smem constant byte address 0x4 - core index']
  #allocation1 [shape = 'u32[144,128]{1,0:T(1,128)}', space=vmem, size = 0x12000, scoped, tag = 'internal scratch']
  %s0 = inlined_call_operand.vmem [shape: f32[31,256], index: 0, kind: input, shape index: {}]
  %s1 = inlined_call_operand.vmem [shape: f32[960,31], index: 1, kind: input, shape index: {}]
  %s2 = inlined_call_operand.vmem [shape: f32[2,960], index: 2, kind: input, shape index: {}]
  %s3 = inlined_call_operand.vmem [shape: f32[2,1], index: 3, kind: input, shape index: {}]
  %s4 = inlined_call_operand.vmem [shape: f32[2,256], index: 4, kind: output, shape index: {}]
  %s5 = sld [smem:[#allocation0]]
  $region26: #{cnn_forward.1} parent=0
    _
  %s7 = ssub.s32 1, %s5
  %s8 = scalar_select 0, %s7, %s5
  // Predicated region
  $region2: #{cnn_forward.1} parent=0 // pred_check
    _
  $region3: #{cnn_forward.1} parent=0 // pred_check_branch
    %10 = sbr.rel (0) target = $region5
  $region4: #{cnn_forward.1} parent=0 // pred_region
    _
  $region5: #{cnn_forward.1} parent=0 // pred_fallthru
    _
  // Predicated region
  $region6: #{cnn_forward.1} parent=0 // pred_check
    _
  $region7: #{cnn_forward.1} parent=0 // pred_check_branch
    %12 = sbr.rel (0) target = $region9
  $region8: #{cnn_forward.1} parent=0 // pred_region
    _
  $region9: #{cnn_forward.1} parent=0 // pred_fallthru
    _
  // Predicated region
  $region10: #{cnn_forward.1} parent=0 // pred_check
    _
  $region11: #{cnn_forward.1} parent=0 // pred_check_branch
    %14 = sbr.rel (0) target = $region13
  $region12: #{cnn_forward.1} parent=0 // pred_region
    _
  $region13: #{cnn_forward.1} parent=0 // pred_fallthru
    _
  // Predicated region
  $region14: #{cnn_forward.1} parent=0 // pred_check
    _
  $region15: #{cnn_forward.1} parent=0 // pred_check_branch
    %16 = sbr.rel (0) target = $region17
  $region16: #{cnn_forward.1} parent=0 // pred_region
    _
  $region17: #{cnn_forward.1} parent=0 // pred_fallthru
    _
  %v17 = vld [vmem:[%s1] sm:$0xff]
  %v18 = vld [vmem:[%s1 + $0x8] sm:$0xff]
  %v19 = vld [vmem:[%s1 + $0x10] sm:$0xff]
  %v20 = vld [vmem:[%s1 + $0x18] sm:$0xff]
  %v21 = vld [vmem:[%s1 + $0x20] sm:$0xff]
  %v22 = vld [vmem:[%s1 + $0x28] sm:$0xff]
  %v23 = vld [vmem:[%s1 + $0x30] sm:$0xff]
  %v24 = vld [vmem:[%s1 + $0x38] sm:$0xff]
  %v25 = vld [vmem:[%s1 + $0x40] sm:$0xff]
  %v26 = vld [vmem:[%s1 + $0x48] sm:$0xff]
  %v27 = vld [vmem:[%s1 + $0x50] sm:$0xff]
  %v28 = vld [vmem:[%s1 + $0x58] sm:$0xff]
  %v29 = vld [vmem:[%s1 + $0x60] sm:$0xff]
  %v30 = vld [vmem:[%s1 + $0x68] sm:$0xff]
  %v31 = vld [vmem:[%s1 + $0x70] sm:$0xff]
  %v32 = vld [vmem:[%s1 + $0x78] sm:$0xff]
  %v33 = vld [vmem:[%s1 + $0x80] sm:$0xff]
  %v34 = vld [vmem:[%s1 + $0x88] sm:$0xff]
  %v35 = vld [vmem:[%s1 + $0x90] sm:$0xff]
  %v36 = vld [vmem:[%s1 + $0x98] sm:$0xff]
  %v37 = vld [vmem:[%s1 + $0xa0] sm:$0xff]
  %v38 = vld [vmem:[%s1 + $0xa8] sm:$0xff]
  %v39 = vld [vmem:[%s1 + $0xb0] sm:$0xff]
  %v40 = vld [vmem:[%s1 + $0xb8] sm:$0xff]
  %v41 = vld [vmem:[%s1 + $0xc0] sm:$0xff]
  %v42 = vld [vmem:[%s1 + $0xc8] sm:$0xff]
  %v43 = vld [vmem:[%s1 + $0xd0] sm:$0xff]
  %v44 = vld [vmem:[%s1 + $0xd8] sm:$0xff]
  %v45 = vld [vmem:[%s1 + $0xe0] sm:$0xff]
  %v46 = vld [vmem:[%s1 + $0xe8] sm:$0xff]
  %v47 = vld [vmem:[%s1 + $0xf0] sm:$0xff]
  %v48 = vld [vmem:[%s1 + $0xf8] sm:$0xff]
  %v49 = vld [vmem:[%s1 + $0x100] sm:$0xff]
  %v50 = vld [vmem:[%s1 + $0x108] sm:$0xff]
  %v51 = vld [vmem:[%s1 + $0x110] sm:$0xff]
  %v52 = vld [vmem:[%s1 + $0x118] sm:$0xff]
  %v53 = vld [vmem:[%s1 + $0x120] sm:$0xff]
  %v54 = vld [vmem:[%s1 + $0x128] sm:$0xff]
  %v55 = vld [vmem:[%s1 + $0x130] sm:$0xff]
  %v56 = vld [vmem:[%s1 + $0x138] sm:$0xff]
  %v57 = vld [vmem:[%s1 + $0x140] sm:$0xff]
  %v58 = vld [vmem:[%s1 + $0x148] sm:$0xff]
  %v59 = vld [vmem:[%s1 + $0x150] sm:$0xff]
  %v60 = vld [vmem:[%s1 + $0x158] sm:$0xff]
  %v61 = vld [vmem:[%s1 + $0x160] sm:$0xff]
  %v62 = vld [vmem:[%s1 + $0x168] sm:$0xff]
  %v63 = vld [vmem:[%s1 + $0x170] sm:$0xff]
  %v64 = vld [vmem:[%s1 + $0x178] sm:$0xff]
  %v65 = vld [vmem:[%s1 + $0x180] sm:$0xff]
  %v66 = vld [vmem:[%s1 + $0x188] sm:$0xff]
  %v67 = vld [vmem:[%s1 + $0x190] sm:$0xff]
  %v68 = vld [vmem:[%s1 + $0x198] sm:$0xff]
  %v69 = vld [vmem:[%s1 + $0x1a0] sm:$0xff]
  %v70 = vld [vmem:[%s1 + $0x1a8] sm:$0xff]
  %v71 = vld [vmem:[%s1 + $0x1b0] sm:$0xff]
  %v72 = vld [vmem:[%s1 + $0x1b8] sm:$0xff]
  %v73 = vld [vmem:[%s1 + $0x1c0] sm:$0xff]
  %v74 = vld [vmem:[%s1 + $0x1c8] sm:$0xff]
  %v75 = vld [vmem:[%s1 + $0x1d0] sm:$0xff]
  %v76 = vld [vmem:[%s1 + $0x1d8] sm:$0xff]
  %v77 = vld [vmem:[%s1 + $0x1e0] sm:$0xff]
  %v78 = vld [vmem:[%s1 + $0x1e8] sm:$0xff]
  %v79 = vld [vmem:[%s1 + $0x1f0] sm:$0xff]
  %v80 = vld [vmem:[%s1 + $0x1f8] sm:$0xff]
  %v81 = vld [vmem:[%s1 + $0x200] sm:$0xff]
  %v82 = vld [vmem:[%s1 + $0x208] sm:$0xff]
  %v83 = vld [vmem:[%s1 + $0x210] sm:$0xff]
  %v84 = vld [vmem:[%s1 + $0x218] sm:$0xff]
  %v85 = vld [vmem:[%s1 + $0x220] sm:$0xff]
  %v86 = vld [vmem:[%s1 + $0x228] sm:$0xff]
  %v87 = vld [vmem:[%s1 + $0x230] sm:$0xff]
  %v88 = vld [vmem:[%s1 + $0x238] sm:$0xff]
  %v89 = vld [vmem:[%s1 + $0x240] sm:$0xff]
  %v90 = vld [vmem:[%s1 + $0x248] sm:$0xff]
  %v91 = vld [vmem:[%s1 + $0x250] sm:$0xff]
  %v92 = vld [vmem:[%s1 + $0x258] sm:$0xff]
  %v93 = vld [vmem:[%s1 + $0x260] sm:$0xff]
  %v94 = vld [vmem:[%s1 + $0x268] sm:$0xff]
  %v95 = vld [vmem:[%s1 + $0x270] sm:$0xff]
  %v96 = vld [vmem:[%s1 + $0x278] sm:$0xff]
  %v97 = vld [vmem:[%s1 + $0x280] sm:$0xff]
  %v98 = vld [vmem:[%s1 + $0x288] sm:$0xff]
  %v99 = vld [vmem:[%s1 + $0x290] sm:$0xff]
  %v100 = vld [vmem:[%s1 + $0x298] sm:$0xff]
  %v101 = vld [vmem:[%s1 + $0x2a0] sm:$0xff]
  %v102 = vld [vmem:[%s1 + $0x2a8] sm:$0xff]
  %v103 = vld [vmem:[%s1 + $0x2b0] sm:$0xff]
  %v104 = vld [vmem:[%s1 + $0x2b8] sm:$0xff]
  %v105 = vld [vmem:[%s1 + $0x2c0] sm:$0xff]
  %v106 = vld [vmem:[%s1 + $0x2c8] sm:$0xff]
  %v107 = vld [vmem:[%s1 + $0x2d0] sm:$0xff]
  %v108 = vld [vmem:[%s1 + $0x2d8] sm:$0xff]
  %v109 = vld [vmem:[%s1 + $0x2e0] sm:$0xff]
  %v110 = vld [vmem:[%s1 + $0x2e8] sm:$0xff]
  %v111 = vld [vmem:[%s1 + $0x2f0] sm:$0xff]
  %v112 = vld [vmem:[%s1 + $0x2f8] sm:$0xff]
  %v113 = vld [vmem:[%s1 + $0x300] sm:$0xff]
  %v114 = vld [vmem:[%s1 + $0x308] sm:$0xff]
  %v115 = vld [vmem:[%s1 + $0x310] sm:$0xff]
  %v116 = vld [vmem:[%s1 + $0x318] sm:$0xff]
  %v117 = vld [vmem:[%s1 + $0x320] sm:$0xff]
  %v118 = vld [vmem:[%s1 + $0x328] sm:$0xff]
  %v119 = vld [vmem:[%s1 + $0x330] sm:$0xff]
  %v120 = vld [vmem:[%s1 + $0x338] sm:$0xff]
  %v121 = vld [vmem:[%s1 + $0x340] sm:$0xff]
  %v122 = vld [vmem:[%s1 + $0x348] sm:$0xff]
  %v123 = vld [vmem:[%s1 + $0x350] sm:$0xff]
  %v124 = vld [vmem:[%s1 + $0x358] sm:$0xff]
  %v125 = vld [vmem:[%s1 + $0x360] sm:$0xff]
  %v126 = vld [vmem:[%s1 + $0x368] sm:$0xff]
  %v127 = vld [vmem:[%s1 + $0x370] sm:$0xff]
  %v128 = vld [vmem:[%s1 + $0x378] sm:$0xff]
  %v129 = vld [vmem:[%s1 + $0x380] sm:$0xff]
  %v130 = vld [vmem:[%s1 + $0x388] sm:$0xff]
  %v131 = vld [vmem:[%s1 + $0x390] sm:$0xff]
  %v132 = vld [vmem:[%s1 + $0x398] sm:$0xff]
  %v133 = vld [vmem:[%s1 + $0x3a0] sm:$0xff]
  %v134 = vld [vmem:[%s1 + $0x3a8] sm:$0xff]
  %v135 = vld [vmem:[%s1 + $0x3b0] sm:$0xff]
  %v136 = vld [vmem:[%s1 + $0x3b8] sm:$0xff]
  %v137 = vld [vmem:[%s0] sm:$0xff]
  %v138 = vld [vmem:[%s0 + $0x8] sm:$0xff]
  %v139 = vld [vmem:[%s0 + $0x10] sm:$0xff]
  %v140 = vld [vmem:[%s0 + $0x18] sm:$0xff]
  %v141 = vld [vmem:[%s0 + $0x20] sm:$0xff]
  %v142 = vld [vmem:[%s0 + $0x28] sm:$0xff]
  %v143 = vld [vmem:[%s0 + $0x30] sm:$0x7f]
  %v144 = vld [vmem:[%s0 + $0x38] sm:$0x7f]
  %vm145 = vcmask 252928
  %v147 = vsel %vm145, %v17, 0
  %v150 = vsel %vm145, %v18, 0
  %v153 = vsel %vm145, %v19, 0
  %v156 = vsel %vm145, %v20, 0
  %v159 = vsel %vm145, %v21, 0
  %v162 = vsel %vm145, %v22, 0
  %v165 = vsel %vm145, %v23, 0
  %v168 = vsel %vm145, %v24, 0
  %v171 = vsel %vm145, %v25, 0
  %v174 = vsel %vm145, %v26, 0
  %v177 = vsel %vm145, %v27, 0
  %v180 = vsel %vm145, %v28, 0
  %v183 = vsel %vm145, %v29, 0
  %v186 = vsel %vm145, %v30, 0
  %v189 = vsel %vm145, %v31, 0
  %v192 = vsel %vm145, %v32, 0
  %v195 = vsel %vm145, %v33, 0
  %v198 = vsel %vm145, %v34, 0
  %v201 = vsel %vm145, %v35, 0
  %v204 = vsel %vm145, %v36, 0
  %v207 = vsel %vm145, %v37, 0
  %v210 = vsel %vm145, %v38, 0
  %v213 = vsel %vm145, %v39, 0
  %v216 = vsel %vm145, %v40, 0
  %v219 = vsel %vm145, %v41, 0
  %v222 = vsel %vm145, %v42, 0
  %v225 = vsel %vm145, %v43, 0
  %v228 = vsel %vm145, %v44, 0
  %v231 = vsel %vm145, %v45, 0
  %v234 = vsel %vm145, %v46, 0
  %v237 = vsel %vm145, %v47, 0
  %v240 = vsel %vm145, %v48, 0
  %v243 = vsel %vm145, %v49, 0
  %v246 = vsel %vm145, %v50, 0
  %v249 = vsel %vm145, %v51, 0
  %v252 = vsel %vm145, %v52, 0
  %v255 = vsel %vm145, %v53, 0
  %v258 = vsel %vm145, %v54, 0
  %v261 = vsel %vm145, %v55, 0
  %v264 = vsel %vm145, %v56, 0
  %v267 = vsel %vm145, %v57, 0
  %v270 = vsel %vm145, %v58, 0
  %v273 = vsel %vm145, %v59, 0
  %v276 = vsel %vm145, %v60, 0
  %v279 = vsel %vm145, %v61, 0
  %v282 = vsel %vm145, %v62, 0
  %v285 = vsel %vm145, %v63, 0
  %v288 = vsel %vm145, %v64, 0
  %v291 = vsel %vm145, %v65, 0
  %v294 = vsel %vm145, %v66, 0
  %v297 = vsel %vm145, %v67, 0
  %v300 = vsel %vm145, %v68, 0
  %v303 = vsel %vm145, %v69, 0
  %v306 = vsel %vm145, %v70, 0
  %v309 = vsel %vm145, %v71, 0
  %v312 = vsel %vm145, %v72, 0
  %v315 = vsel %vm145, %v73, 0
  %v318 = vsel %vm145, %v74, 0
  %v321 = vsel %vm145, %v75, 0
  %v324 = vsel %vm145, %v76, 0
  %v327 = vsel %vm145, %v77, 0
  %v330 = vsel %vm145, %v78, 0
  %v333 = vsel %vm145, %v79, 0
  %v336 = vsel %vm145, %v80, 0
  %v339 = vsel %vm145, %v81, 0
  %v342 = vsel %vm145, %v82, 0
  %v345 = vsel %vm145, %v83, 0
  %v348 = vsel %vm145, %v84, 0
  %v351 = vsel %vm145, %v85, 0
  %v354 = vsel %vm145, %v86, 0
  %v357 = vsel %vm145, %v87, 0
  %v360 = vsel %vm145, %v88, 0
  %v363 = vsel %vm145, %v89, 0
  %v366 = vsel %vm145, %v90, 0
  %v369 = vsel %vm145, %v91, 0
  %v372 = vsel %vm145, %v92, 0
  %v375 = vsel %vm145, %v93, 0
  %v378 = vsel %vm145, %v94, 0
  %v381 = vsel %vm145, %v95, 0
  %v384 = vsel %vm145, %v96, 0
  %v387 = vsel %vm145, %v97, 0
  %v390 = vsel %vm145, %v98, 0
  %v393 = vsel %vm145, %v99, 0
  %v396 = vsel %vm145, %v100, 0
  %v399 = vsel %vm145, %v101, 0
  %v402 = vsel %vm145, %v102, 0
  %v405 = vsel %vm145, %v103, 0
  %v408 = vsel %vm145, %v104, 0
  %v411 = vsel %vm145, %v105, 0
  %v414 = vsel %vm145, %v106, 0
  %v417 = vsel %vm145, %v107, 0
  %v420 = vsel %vm145, %v108, 0
  %v423 = vsel %vm145, %v109, 0
  %v426 = vsel %vm145, %v110, 0
  %v429 = vsel %vm145, %v111, 0
  %v432 = vsel %vm145, %v112, 0
  %v435 = vsel %vm145, %v113, 0
  %v438 = vsel %vm145, %v114, 0
  %v441 = vsel %vm145, %v115, 0
  %v444 = vsel %vm145, %v116, 0
  %v447 = vsel %vm145, %v117, 0
  %v450 = vsel %vm145, %v118, 0
  %v453 = vsel %vm145, %v119, 0
  %v456 = vsel %vm145, %v120, 0
  %v459 = vsel %vm145, %v121, 0
  %v462 = vsel %vm145, %v122, 0
  %v465 = vsel %vm145, %v123, 0
  %v468 = vsel %vm145, %v124, 0
  %v471 = vsel %vm145, %v125, 0
  %v474 = vsel %vm145, %v126, 0
  %v477 = vsel %vm145, %v127, 0
  %v480 = vsel %vm145, %v128, 0
  %v483 = vsel %vm145, %v129, 0
  %v486 = vsel %vm145, %v130, 0
  %v489 = vsel %vm145, %v131, 0
  %v492 = vsel %vm145, %v132, 0
  %v495 = vsel %vm145, %v133, 0
  %v498 = vsel %vm145, %v134, 0
  %v501 = vsel %vm145, %v135, 0
  %v504 = vsel %vm145, %v136, 0
  %vm506 = vcmask 1046528
  %v508 = vsel %vm506, %v143, 0
  %v511 = vsel %vm506, %v144, 0
  %513 = vmatprep.subr.mxu0 0.0
  %514 = vmatpush1.msra.mxu0 0.0
  %515 = vmatprep.subr.mxu0 0.0
  %516 = vmatpush1.msra.mxu0 0.0
  %517 = vmatprep.subr.mxu0 0.0
  %518 = vmatpush1.msra.mxu0 0.0
  %519 = vmatprep.subr.mxu0 0.0
  %520 = vmatpush1.msra.mxu0 0.0
  %521 = vmatprep.subr.mxu0 0.0
  %522 = vmatpush1.msra.mxu0 0.0
  %523 = vmatprep.subr.mxu0 0.0
  %524 = vmatpush1.msra.mxu0 0.0
  %525 = vmatprep.subr.mxu0 0.0
  %526 = vmatpush1.msra.mxu0 0.0
  %527 = vmatprep.subr.mxu0 0.0
  %528 = vmatpush1.msra.mxu0 0.0
  %529 = vmatprep.subr.mxu0 0.0
  %530 = vmatpush1.msra.mxu0 0.0
  %531 = vmatprep.subr.mxu0 0.0
  %532 = vmatpush1.msra.mxu0 0.0
  %533 = vmatprep.subr.mxu0 0.0
  %534 = vmatpush1.msra.mxu0 0.0
  %535 = vmatprep.subr.mxu0 0.0
  %536 = vmatpush1.msra.mxu0 0.0
  %537 = vmatprep.subr.mxu0 %v511
  %538 = vmatpush1.msra.mxu0 %v508
  %539 = vmatprep.subr.mxu0 %v142
  %540 = vmatpush1.msra.mxu0 %v141
  %541 = vmatprep.subr.mxu0 %v140
  %542 = vmatpush1.msra.mxu0 %v139
  %543 = vmatprep.subr.mxu0 %v138
  %544 = vmatpush1.msra.mxu0 %v137
  %545 = vmatprep.subr.mxu0 0.0
  %546 = vmatpush2.msra.mxu0 0.0
  %547 = vmatprep.subr.mxu0 0.0
  %548 = vmatpush2.msra.mxu0 0.0
  %549 = vmatprep.subr.mxu0 0.0
  %550 = vmatpush2.msra.mxu0 0.0
  %551 = vmatprep.subr.mxu0 0.0
  %552 = vmatpush2.msra.mxu0 0.0
  %553 = vmatprep.subr.mxu0 0.0
  %554 = vmatpush2.msra.mxu0 0.0
  %555 = vmatprep.subr.mxu0 0.0
  %556 = vmatpush2.msra.mxu0 0.0
  %557 = vmatprep.subr.mxu0 0.0
  %558 = vmatpush2.msra.mxu0 0.0
  %559 = vmatprep.subr.mxu0 0.0
  %560 = vmatpush2.msra.mxu0 0.0
  %561 = vmatprep.subr.mxu0 0.0
  %562 = vmatpush2.msra.mxu0 0.0
  %563 = vmatprep.subr.mxu0 0.0
  %564 = vmatpush2.msra.mxu0 0.0
  %565 = vmatprep.subr.mxu0 0.0
  %566 = vmatpush2.msra.mxu0 0.0
  %567 = vmatprep.subr.mxu0 0.0
  %568 = vmatpush2.msra.mxu0 0.0
  %569 = vmatprep.subr.mxu0 0.0
  %570 = vmatpush2.msra.mxu0 0.0
  %571 = vmatprep.subr.mxu0 0.0
  %572 = vmatpush2.msra.mxu0 0.0
  %573 = vmatprep.subr.mxu0 0.0
  %574 = vmatpush2.msra.mxu0 0.0
  %575 = vmatprep.subr.mxu0 0.0
  %576 = vmatpush2.msra.mxu0 0.0
  %577 = vmatprep.mubr.f32.mxu0 0.0
  %578 = vmatmul.mubr.f32.gmra.mxu0 %v147
  %v579 = vpop.f32.mrf.mxu0
  %v580 = vadd.f32 0.0, %v579
  %v581 = vpop.f32.mrf.mxu0
  %v582 = vadd.f32 0.0, %v581
  %583 = vmatprep.mubr.f32.mxu0 0.0
  %584 = vmatmul.mubr.f32.gmra.mxu0 %v150
  %v585 = vpop.f32.mrf.mxu0
  %v586 = vadd.f32 0.0, %v585
  %v587 = vpop.f32.mrf.mxu0
  %v588 = vadd.f32 0.0, %v587
  %589 = vmatprep.mubr.f32.mxu0 0.0
  %590 = vmatmul.mubr.f32.gmra.mxu0 %v153
  %v591 = vpop.f32.mrf.mxu0
  %v592 = vadd.f32 0.0, %v591
  %v593 = vpop.f32.mrf.mxu0
  %v594 = vadd.f32 0.0, %v593
  %595 = vmatprep.mubr.f32.mxu0 0.0
  %596 = vmatmul.mubr.f32.gmra.mxu0 %v156
  %v597 = vpop.f32.mrf.mxu0
  %v598 = vadd.f32 0.0, %v597
  %v599 = vpop.f32.mrf.mxu0
  %v600 = vadd.f32 0.0, %v599
  %601 = vmatprep.mubr.f32.mxu0 0.0
  %602 = vmatmul.mubr.f32.gmra.mxu0 %v159
  %v603 = vpop.f32.mrf.mxu0
  %v604 = vadd.f32 0.0, %v603
  %v605 = vpop.f32.mrf.mxu0
  %v606 = vadd.f32 0.0, %v605
  %607 = vmatprep.mubr.f32.mxu0 0.0
  %608 = vmatmul.mubr.f32.gmra.mxu0 %v162
  %v609 = vpop.f32.mrf.mxu0
  %v610 = vadd.f32 0.0, %v609
  %v611 = vpop.f32.mrf.mxu0
  %v612 = vadd.f32 0.0, %v611
  %613 = vmatprep.mubr.f32.mxu0 0.0
  %614 = vmatmul.mubr.f32.gmra.mxu0 %v165
  %v615 = vpop.f32.mrf.mxu0
  %v616 = vadd.f32 0.0, %v615
  %v617 = vpop.f32.mrf.mxu0
  %v618 = vadd.f32 0.0, %v617
  %619 = vmatprep.mubr.f32.mxu0 0.0
  %620 = vmatmul.mubr.f32.gmra.mxu0 %v168
  %v621 = vpop.f32.mrf.mxu0
  %v622 = vadd.f32 0.0, %v621
  %v623 = vpop.f32.mrf.mxu0
  %v624 = vadd.f32 0.0, %v623
  %625 = vmatprep.mubr.f32.mxu0 0.0
  %626 = vmatmul.mubr.f32.gmra.mxu0 %v171
  %v627 = vpop.f32.mrf.mxu0
  %v628 = vadd.f32 0.0, %v627
  %v629 = vpop.f32.mrf.mxu0
  %v630 = vadd.f32 0.0, %v629
  %631 = vmatprep.mubr.f32.mxu0 0.0
  %632 = vmatmul.mubr.f32.gmra.mxu0 %v174
  %v633 = vpop.f32.mrf.mxu0
  %v634 = vadd.f32 0.0, %v633
  %v635 = vpop.f32.mrf.mxu0
  %v636 = vadd.f32 0.0, %v635
  %637 = vmatprep.mubr.f32.mxu0 0.0
  %638 = vmatmul.mubr.f32.gmra.mxu0 %v177
  %v639 = vpop.f32.mrf.mxu0
  %v640 = vadd.f32 0.0, %v639
  %v641 = vpop.f32.mrf.mxu0
  %v642 = vadd.f32 0.0, %v641
  %643 = vmatprep.mubr.f32.mxu0 0.0
  %644 = vmatmul.mubr.f32.gmra.mxu0 %v180
  %v645 = vpop.f32.mrf.mxu0
  %v646 = vadd.f32 0.0, %v645
  %v647 = vpop.f32.mrf.mxu0
  %v648 = vadd.f32 0.0, %v647
  %649 = vmatprep.mubr.f32.mxu0 0.0
  %650 = vmatmul.mubr.f32.gmra.mxu0 %v183
  %v651 = vpop.f32.mrf.mxu0
  %v652 = vadd.f32 0.0, %v651
  %v653 = vpop.f32.mrf.mxu0
  %v654 = vadd.f32 0.0, %v653
  %655 = vmatprep.mubr.f32.mxu0 0.0
  %656 = vmatmul.mubr.f32.gmra.mxu0 %v186
  %v657 = vpop.f32.mrf.mxu0
  %v658 = vadd.f32 0.0, %v657
  %v659 = vpop.f32.mrf.mxu0
  %v660 = vadd.f32 0.0, %v659
  %661 = vmatprep.mubr.f32.mxu0 0.0
  %662 = vmatmul.mubr.f32.gmra.mxu0 %v189
  %v663 = vpop.f32.mrf.mxu0
  %v664 = vadd.f32 0.0, %v663
  %v665 = vpop.f32.mrf.mxu0
  %v666 = vadd.f32 0.0, %v665
  %667 = vmatprep.mubr.f32.mxu0 0.0
  %668 = vmatmul.mubr.f32.gmra.mxu0 %v192
  %v669 = vpop.f32.mrf.mxu0
  %v670 = vadd.f32 0.0, %v669
  %v671 = vpop.f32.mrf.mxu0
  %v672 = vadd.f32 0.0, %v671
  %673 = vmatprep.mubr.f32.mxu0 0.0
  %674 = vmatmul.mubr.f32.gmra.mxu0 %v195
  %v675 = vpop.f32.mrf.mxu0
  %v676 = vadd.f32 0.0, %v675
  %v677 = vpop.f32.mrf.mxu0
  %v678 = vadd.f32 0.0, %v677
  %679 = vmatprep.mubr.f32.mxu0 0.0
  %680 = vmatmul.mubr.f32.gmra.mxu0 %v198
  %v681 = vpop.f32.mrf.mxu0
  %v682 = vadd.f32 0.0, %v681
  %v683 = vpop.f32.mrf.mxu0
  %v684 = vadd.f32 0.0, %v683
  %685 = vmatprep.mubr.f32.mxu0 0.0
  %686 = vmatmul.mubr.f32.gmra.mxu0 %v201
  %v687 = vpop.f32.mrf.mxu0
  %v688 = vadd.f32 0.0, %v687
  %v689 = vpop.f32.mrf.mxu0
  %v690 = vadd.f32 0.0, %v689
  %691 = vmatprep.mubr.f32.mxu0 0.0
  %692 = vmatmul.mubr.f32.gmra.mxu0 %v204
  %v693 = vpop.f32.mrf.mxu0
  %v694 = vadd.f32 0.0, %v693
  %v695 = vpop.f32.mrf.mxu0
  %v696 = vadd.f32 0.0, %v695
  %697 = vmatprep.mubr.f32.mxu0 0.0
  %698 = vmatmul.mubr.f32.gmra.mxu0 %v207
  %v699 = vpop.f32.mrf.mxu0
  %v700 = vadd.f32 0.0, %v699
  %v701 = vpop.f32.mrf.mxu0
  %v702 = vadd.f32 0.0, %v701
  %703 = vmatprep.mubr.f32.mxu0 0.0
  %704 = vmatmul.mubr.f32.gmra.mxu0 %v210
  %v705 = vpop.f32.mrf.mxu0
  %v706 = vadd.f32 0.0, %v705
  %v707 = vpop.f32.mrf.mxu0
  %v708 = vadd.f32 0.0, %v707
  %709 = vmatprep.mubr.f32.mxu0 0.0
  %710 = vmatmul.mubr.f32.gmra.mxu0 %v213
  %v711 = vpop.f32.mrf.mxu0
  %v712 = vadd.f32 0.0, %v711
  %v713 = vpop.f32.mrf.mxu0
  %v714 = vadd.f32 0.0, %v713
  %715 = vmatprep.mubr.f32.mxu0 0.0
  %716 = vmatmul.mubr.f32.gmra.mxu0 %v216
  %v717 = vpop.f32.mrf.mxu0
  %v718 = vadd.f32 0.0, %v717
  %v719 = vpop.f32.mrf.mxu0
  %v720 = vadd.f32 0.0, %v719
  %721 = vmatprep.mubr.f32.mxu0 0.0
  %722 = vmatmul.mubr.f32.gmra.mxu0 %v219
  %v723 = vpop.f32.mrf.mxu0
  %v724 = vadd.f32 0.0, %v723
  %v725 = vpop.f32.mrf.mxu0
  %v726 = vadd.f32 0.0, %v725
  %727 = vmatprep.mubr.f32.mxu0 0.0
  %728 = vmatmul.mubr.f32.gmra.mxu0 %v222
  %v729 = vpop.f32.mrf.mxu0
  %v730 = vadd.f32 0.0, %v729
  %v731 = vpop.f32.mrf.mxu0
  %v732 = vadd.f32 0.0, %v731
  %733 = vmatprep.mubr.f32.mxu0 0.0
  %734 = vmatmul.mubr.f32.gmra.mxu0 %v225
  %v735 = vpop.f32.mrf.mxu0
  %v736 = vadd.f32 0.0, %v735
  %v737 = vpop.f32.mrf.mxu0
  %v738 = vadd.f32 0.0, %v737
  %739 = vmatprep.mubr.f32.mxu0 0.0
  %740 = vmatmul.mubr.f32.gmra.mxu0 %v228
  %v741 = vpop.f32.mrf.mxu0
  %v742 = vadd.f32 0.0, %v741
  %v743 = vpop.f32.mrf.mxu0
  %v744 = vadd.f32 0.0, %v743
  %745 = vmatprep.mubr.f32.mxu0 0.0
  %746 = vmatmul.mubr.f32.gmra.mxu0 %v231
  %v747 = vpop.f32.mrf.mxu0
  %v748 = vadd.f32 0.0, %v747
  %v749 = vpop.f32.mrf.mxu0
  %v750 = vadd.f32 0.0, %v749
  %751 = vmatprep.mubr.f32.mxu0 0.0
  %752 = vmatmul.mubr.f32.gmra.mxu0 %v234
  %v753 = vpop.f32.mrf.mxu0
  %v754 = vadd.f32 0.0, %v753
  %v755 = vpop.f32.mrf.mxu0
  %v756 = vadd.f32 0.0, %v755
  %757 = vmatprep.mubr.f32.mxu0 0.0
  %758 = vmatmul.mubr.f32.gmra.mxu0 %v237
  %v759 = vpop.f32.mrf.mxu0
  %v760 = vadd.f32 0.0, %v759
  %v761 = vpop.f32.mrf.mxu0
  %v762 = vadd.f32 0.0, %v761
  %763 = vmatprep.mubr.f32.mxu0 0.0
  %764 = vmatmul.mubr.f32.gmra.mxu0 %v240
  %v765 = vpop.f32.mrf.mxu0
  %v766 = vadd.f32 0.0, %v765
  %v767 = vpop.f32.mrf.mxu0
  %v768 = vadd.f32 0.0, %v767
  %769 = vmatprep.mubr.f32.mxu0 0.0
  %770 = vmatmul.mubr.f32.gmra.mxu0 %v243
  %v771 = vpop.f32.mrf.mxu0
  %v772 = vadd.f32 0.0, %v771
  %v773 = vpop.f32.mrf.mxu0
  %v774 = vadd.f32 0.0, %v773
  %775 = vmatprep.mubr.f32.mxu0 0.0
  %776 = vmatmul.mubr.f32.gmra.mxu0 %v246
  %v777 = vpop.f32.mrf.mxu0
  %v778 = vadd.f32 0.0, %v777
  %v779 = vpop.f32.mrf.mxu0
  %v780 = vadd.f32 0.0, %v779
  %781 = vmatprep.mubr.f32.mxu0 0.0
  %782 = vmatmul.mubr.f32.gmra.mxu0 %v249
  %v783 = vpop.f32.mrf.mxu0
  %v784 = vadd.f32 0.0, %v783
  %v785 = vpop.f32.mrf.mxu0
  %v786 = vadd.f32 0.0, %v785
  %787 = vmatprep.mubr.f32.mxu0 0.0
  %788 = vmatmul.mubr.f32.gmra.mxu0 %v252
  %v789 = vpop.f32.mrf.mxu0
  %v790 = vadd.f32 0.0, %v789
  %v791 = vpop.f32.mrf.mxu0
  %v792 = vadd.f32 0.0, %v791
  %793 = vmatprep.mubr.f32.mxu0 0.0
  %794 = vmatmul.mubr.f32.gmra.mxu0 %v255
  %v795 = vpop.f32.mrf.mxu0
  %v796 = vadd.f32 0.0, %v795
  %v797 = vpop.f32.mrf.mxu0
  %v798 = vadd.f32 0.0, %v797
  %799 = vmatprep.mubr.f32.mxu0 0.0
  %800 = vmatmul.mubr.f32.gmra.mxu0 %v258
  %v801 = vpop.f32.mrf.mxu0
  %v802 = vadd.f32 0.0, %v801
  %v803 = vpop.f32.mrf.mxu0
  %v804 = vadd.f32 0.0, %v803
  %805 = vmatprep.mubr.f32.mxu0 0.0
  %806 = vmatmul.mubr.f32.gmra.mxu0 %v261
  %v807 = vpop.f32.mrf.mxu0
  %v808 = vadd.f32 0.0, %v807
  %v809 = vpop.f32.mrf.mxu0
  %v810 = vadd.f32 0.0, %v809
  %811 = vmatprep.mubr.f32.mxu0 0.0
  %812 = vmatmul.mubr.f32.gmra.mxu0 %v264
  %v813 = vpop.f32.mrf.mxu0
  %v814 = vadd.f32 0.0, %v813
  %v815 = vpop.f32.mrf.mxu0
  %v816 = vadd.f32 0.0, %v815
  %817 = vmatprep.mubr.f32.mxu0 0.0
  %818 = vmatmul.mubr.f32.gmra.mxu0 %v267
  %v819 = vpop.f32.mrf.mxu0
  %v820 = vadd.f32 0.0, %v819
  %v821 = vpop.f32.mrf.mxu0
  %v822 = vadd.f32 0.0, %v821
  %823 = vmatprep.mubr.f32.mxu0 0.0
  %824 = vmatmul.mubr.f32.gmra.mxu0 %v270
  %v825 = vpop.f32.mrf.mxu0
  %v826 = vadd.f32 0.0, %v825
  %v827 = vpop.f32.mrf.mxu0
  %v828 = vadd.f32 0.0, %v827
  %829 = vmatprep.mubr.f32.mxu0 0.0
  %830 = vmatmul.mubr.f32.gmra.mxu0 %v273
  %v831 = vpop.f32.mrf.mxu0
  %v832 = vadd.f32 0.0, %v831
  %v833 = vpop.f32.mrf.mxu0
  %v834 = vadd.f32 0.0, %v833
  %835 = vmatprep.mubr.f32.mxu0 0.0
  %836 = vmatmul.mubr.f32.gmra.mxu0 %v276
  %v837 = vpop.f32.mrf.mxu0
  %v838 = vadd.f32 0.0, %v837
  %v839 = vpop.f32.mrf.mxu0
  %v840 = vadd.f32 0.0, %v839
  %841 = vmatprep.mubr.f32.mxu0 0.0
  %842 = vmatmul.mubr.f32.gmra.mxu0 %v279
  %v843 = vpop.f32.mrf.mxu0
  %v844 = vadd.f32 0.0, %v843
  %v845 = vpop.f32.mrf.mxu0
  %v846 = vadd.f32 0.0, %v845
  %847 = vmatprep.mubr.f32.mxu0 0.0
  %848 = vmatmul.mubr.f32.gmra.mxu0 %v282
  %v849 = vpop.f32.mrf.mxu0
  %v850 = vadd.f32 0.0, %v849
  %v851 = vpop.f32.mrf.mxu0
  %v852 = vadd.f32 0.0, %v851
  %853 = vmatprep.mubr.f32.mxu0 0.0
  %854 = vmatmul.mubr.f32.gmra.mxu0 %v285
  %v855 = vpop.f32.mrf.mxu0
  %v856 = vadd.f32 0.0, %v855
  %v857 = vpop.f32.mrf.mxu0
  %v858 = vadd.f32 0.0, %v857
  %859 = vmatprep.mubr.f32.mxu0 0.0
  %860 = vmatmul.mubr.f32.gmra.mxu0 %v288
  %v861 = vpop.f32.mrf.mxu0
  %v862 = vadd.f32 0.0, %v861
  %v863 = vpop.f32.mrf.mxu0
  %v864 = vadd.f32 0.0, %v863
  %865 = vmatprep.mubr.f32.mxu0 0.0
  %866 = vmatmul.mubr.f32.gmra.mxu0 %v291
  %v867 = vpop.f32.mrf.mxu0
  %v868 = vadd.f32 0.0, %v867
  %v869 = vpop.f32.mrf.mxu0
  %v870 = vadd.f32 0.0, %v869
  %871 = vmatprep.mubr.f32.mxu0 0.0
  %872 = vmatmul.mubr.f32.gmra.mxu0 %v294
  %v873 = vpop.f32.mrf.mxu0
  %v874 = vadd.f32 0.0, %v873
  %v875 = vpop.f32.mrf.mxu0
  %v876 = vadd.f32 0.0, %v875
  %877 = vmatprep.mubr.f32.mxu0 0.0
  %878 = vmatmul.mubr.f32.gmra.mxu0 %v297
  %v879 = vpop.f32.mrf.mxu0
  %v880 = vadd.f32 0.0, %v879
  %v881 = vpop.f32.mrf.mxu0
  %v882 = vadd.f32 0.0, %v881
  %883 = vmatprep.mubr.f32.mxu0 0.0
  %884 = vmatmul.mubr.f32.gmra.mxu0 %v300
  %v885 = vpop.f32.mrf.mxu0
  %v886 = vadd.f32 0.0, %v885
  %v887 = vpop.f32.mrf.mxu0
  %v888 = vadd.f32 0.0, %v887
  %889 = vmatprep.mubr.f32.mxu0 0.0
  %890 = vmatmul.mubr.f32.gmra.mxu0 %v303
  %v891 = vpop.f32.mrf.mxu0
  %v892 = vadd.f32 0.0, %v891
  %v893 = vpop.f32.mrf.mxu0
  %v894 = vadd.f32 0.0, %v893
  %895 = vmatprep.mubr.f32.mxu0 0.0
  %896 = vmatmul.mubr.f32.gmra.mxu0 %v306
  %v897 = vpop.f32.mrf.mxu0
  %v898 = vadd.f32 0.0, %v897
  %v899 = vpop.f32.mrf.mxu0
  %v900 = vadd.f32 0.0, %v899
  %901 = vmatprep.mubr.f32.mxu0 0.0
  %902 = vmatmul.mubr.f32.gmra.mxu0 %v309
  %v903 = vpop.f32.mrf.mxu0
  %v904 = vadd.f32 0.0, %v903
  %v905 = vpop.f32.mrf.mxu0
  %v906 = vadd.f32 0.0, %v905
  %907 = vmatprep.mubr.f32.mxu0 0.0
  %908 = vmatmul.mubr.f32.gmra.mxu0 %v312
  %v909 = vpop.f32.mrf.mxu0
  %v910 = vadd.f32 0.0, %v909
  %v911 = vpop.f32.mrf.mxu0
  %v912 = vadd.f32 0.0, %v911
  %913 = vmatprep.mubr.f32.mxu0 0.0
  %914 = vmatmul.mubr.f32.gmra.mxu0 %v315
  %v915 = vpop.f32.mrf.mxu0
  %v916 = vadd.f32 0.0, %v915
  %v917 = vpop.f32.mrf.mxu0
  %v918 = vadd.f32 0.0, %v917
  %919 = vmatprep.mubr.f32.mxu0 0.0
  %920 = vmatmul.mubr.f32.gmra.mxu0 %v318
  %v921 = vpop.f32.mrf.mxu0
  %v922 = vadd.f32 0.0, %v921
  %v923 = vpop.f32.mrf.mxu0
  %v924 = vadd.f32 0.0, %v923
  %925 = vmatprep.mubr.f32.mxu0 0.0
  %926 = vmatmul.mubr.f32.gmra.mxu0 %v321
  %v927 = vpop.f32.mrf.mxu0
  %v928 = vadd.f32 0.0, %v927
  %v929 = vpop.f32.mrf.mxu0
  %v930 = vadd.f32 0.0, %v929
  %931 = vmatprep.mubr.f32.mxu0 0.0
  %932 = vmatmul.mubr.f32.gmra.mxu0 %v324
  %v933 = vpop.f32.mrf.mxu0
  %v934 = vadd.f32 0.0, %v933
  %v935 = vpop.f32.mrf.mxu0
  %v936 = vadd.f32 0.0, %v935
  %937 = vmatprep.mubr.f32.mxu0 0.0
  %938 = vmatmul.mubr.f32.gmra.mxu0 %v327
  %v939 = vpop.f32.mrf.mxu0
  %v940 = vadd.f32 0.0, %v939
  %v941 = vpop.f32.mrf.mxu0
  %v942 = vadd.f32 0.0, %v941
  %943 = vmatprep.mubr.f32.mxu0 0.0
  %944 = vmatmul.mubr.f32.gmra.mxu0 %v330
  %v945 = vpop.f32.mrf.mxu0
  %v946 = vadd.f32 0.0, %v945
  %v947 = vpop.f32.mrf.mxu0
  %v948 = vadd.f32 0.0, %v947
  %949 = vmatprep.mubr.f32.mxu0 0.0
  %950 = vmatmul.mubr.f32.gmra.mxu0 %v333
  %v951 = vpop.f32.mrf.mxu0
  %v952 = vadd.f32 0.0, %v951
  %v953 = vpop.f32.mrf.mxu0
  %v954 = vadd.f32 0.0, %v953
  %955 = vmatprep.mubr.f32.mxu0 0.0
  %956 = vmatmul.mubr.f32.gmra.mxu0 %v336
  %v957 = vpop.f32.mrf.mxu0
  %v958 = vadd.f32 0.0, %v957
  %v959 = vpop.f32.mrf.mxu0
  %v960 = vadd.f32 0.0, %v959
  %961 = vmatprep.mubr.f32.mxu0 0.0
  %962 = vmatmul.mubr.f32.gmra.mxu0 %v339
  %v963 = vpop.f32.mrf.mxu0
  %v964 = vadd.f32 0.0, %v963
  %v965 = vpop.f32.mrf.mxu0
  %v966 = vadd.f32 0.0, %v965
  %967 = vmatprep.mubr.f32.mxu0 0.0
  %968 = vmatmul.mubr.f32.gmra.mxu0 %v342
  %v969 = vpop.f32.mrf.mxu0
  %v970 = vadd.f32 0.0, %v969
  %v971 = vpop.f32.mrf.mxu0
  %v972 = vadd.f32 0.0, %v971
  %973 = vmatprep.mubr.f32.mxu0 0.0
  %974 = vmatmul.mubr.f32.gmra.mxu0 %v345
  %v975 = vpop.f32.mrf.mxu0
  %v976 = vadd.f32 0.0, %v975
  %v977 = vpop.f32.mrf.mxu0
  %v978 = vadd.f32 0.0, %v977
  %979 = vmatprep.mubr.f32.mxu0 0.0
  %980 = vmatmul.mubr.f32.gmra.mxu0 %v348
  %v981 = vpop.f32.mrf.mxu0
  %v982 = vadd.f32 0.0, %v981
  %v983 = vpop.f32.mrf.mxu0
  %v984 = vadd.f32 0.0, %v983
  %985 = vmatprep.mubr.f32.mxu0 0.0
  %986 = vmatmul.mubr.f32.gmra.mxu0 %v351
  %v987 = vpop.f32.mrf.mxu0
  %v988 = vadd.f32 0.0, %v987
  %v989 = vpop.f32.mrf.mxu0
  %v990 = vadd.f32 0.0, %v989
  %991 = vmatprep.mubr.f32.mxu0 0.0
  %992 = vmatmul.mubr.f32.gmra.mxu0 %v354
  %v993 = vpop.f32.mrf.mxu0
  %v994 = vadd.f32 0.0, %v993
  %v995 = vpop.f32.mrf.mxu0
  %v996 = vadd.f32 0.0, %v995
  %997 = vmatprep.mubr.f32.mxu0 0.0
  %998 = vmatmul.mubr.f32.gmra.mxu0 %v357
  %v999 = vpop.f32.mrf.mxu0
  %v1000 = vadd.f32 0.0, %v999
  %v1001 = vpop.f32.mrf.mxu0
  %v1002 = vadd.f32 0.0, %v1001
  %1003 = vmatprep.mubr.f32.mxu0 0.0
  %1004 = vmatmul.mubr.f32.gmra.mxu0 %v360
  %v1005 = vpop.f32.mrf.mxu0
  %v1006 = vadd.f32 0.0, %v1005
  %v1007 = vpop.f32.mrf.mxu0
  %v1008 = vadd.f32 0.0, %v1007
  %1009 = vmatprep.mubr.f32.mxu0 0.0
  %1010 = vmatmul.mubr.f32.gmra.mxu0 %v363
  %v1011 = vpop.f32.mrf.mxu0
  %v1012 = vadd.f32 0.0, %v1011
  %v1013 = vpop.f32.mrf.mxu0
  %v1014 = vadd.f32 0.0, %v1013
  %1015 = vmatprep.mubr.f32.mxu0 0.0
  %1016 = vmatmul.mubr.f32.gmra.mxu0 %v366
  %v1017 = vpop.f32.mrf.mxu0
  %v1018 = vadd.f32 0.0, %v1017
  %v1019 = vpop.f32.mrf.mxu0
  %v1020 = vadd.f32 0.0, %v1019
  %1021 = vmatprep.mubr.f32.mxu0 0.0
  %1022 = vmatmul.mubr.f32.gmra.mxu0 %v369
  %v1023 = vpop.f32.mrf.mxu0
  %v1024 = vadd.f32 0.0, %v1023
  %v1025 = vpop.f32.mrf.mxu0
  %v1026 = vadd.f32 0.0, %v1025
  %1027 = vmatprep.mubr.f32.mxu0 0.0
  %1028 = vmatmul.mubr.f32.gmra.mxu0 %v372
  %v1029 = vpop.f32.mrf.mxu0
  %v1030 = vadd.f32 0.0, %v1029
  %v1031 = vpop.f32.mrf.mxu0
  %v1032 = vadd.f32 0.0, %v1031
  %1033 = vmatprep.mubr.f32.mxu0 0.0
  %1034 = vmatmul.mubr.f32.gmra.mxu0 %v375
  %v1035 = vpop.f32.mrf.mxu0
  %v1036 = vadd.f32 0.0, %v1035
  %v1037 = vpop.f32.mrf.mxu0
  %v1038 = vadd.f32 0.0, %v1037
  %1039 = vmatprep.mubr.f32.mxu0 0.0
  %1040 = vmatmul.mubr.f32.gmra.mxu0 %v378
  %v1041 = vpop.f32.mrf.mxu0
  %v1042 = vadd.f32 0.0, %v1041
  %v1043 = vpop.f32.mrf.mxu0
  %v1044 = vadd.f32 0.0, %v1043
  %1045 = vmatprep.mubr.f32.mxu0 0.0
  %1046 = vmatmul.mubr.f32.gmra.mxu0 %v381
  %v1047 = vpop.f32.mrf.mxu0
  %v1048 = vadd.f32 0.0, %v1047
  %v1049 = vpop.f32.mrf.mxu0
  %v1050 = vadd.f32 0.0, %v1049
  %1051 = vmatprep.mubr.f32.mxu0 0.0
  %1052 = vmatmul.mubr.f32.gmra.mxu0 %v384
  %v1053 = vpop.f32.mrf.mxu0
  %v1054 = vadd.f32 0.0, %v1053
  %v1055 = vpop.f32.mrf.mxu0
  %v1056 = vadd.f32 0.0, %v1055
  %1057 = vmatprep.mubr.f32.mxu0 0.0
  %1058 = vmatmul.mubr.f32.gmra.mxu0 %v387
  %v1059 = vpop.f32.mrf.mxu0
  %v1060 = vadd.f32 0.0, %v1059
  %v1061 = vpop.f32.mrf.mxu0
  %v1062 = vadd.f32 0.0, %v1061
  %1063 = vmatprep.mubr.f32.mxu0 0.0
  %1064 = vmatmul.mubr.f32.gmra.mxu0 %v390
  %v1065 = vpop.f32.mrf.mxu0
  %v1066 = vadd.f32 0.0, %v1065
  %v1067 = vpop.f32.mrf.mxu0
  %v1068 = vadd.f32 0.0, %v1067
  %1069 = vmatprep.mubr.f32.mxu0 0.0
  %1070 = vmatmul.mubr.f32.gmra.mxu0 %v393
  %v1071 = vpop.f32.mrf.mxu0
  %v1072 = vadd.f32 0.0, %v1071
  %v1073 = vpop.f32.mrf.mxu0
  %v1074 = vadd.f32 0.0, %v1073
  %1075 = vmatprep.mubr.f32.mxu0 0.0
  %1076 = vmatmul.mubr.f32.gmra.mxu0 %v396
  %v1077 = vpop.f32.mrf.mxu0
  %v1078 = vadd.f32 0.0, %v1077
  %v1079 = vpop.f32.mrf.mxu0
  %v1080 = vadd.f32 0.0, %v1079
  %1081 = vmatprep.mubr.f32.mxu0 0.0
  %1082 = vmatmul.mubr.f32.gmra.mxu0 %v399
  %v1083 = vpop.f32.mrf.mxu0
  %v1084 = vadd.f32 0.0, %v1083
  %v1085 = vpop.f32.mrf.mxu0
  %v1086 = vadd.f32 0.0, %v1085
  %1087 = vmatprep.mubr.f32.mxu0 0.0
  %1088 = vmatmul.mubr.f32.gmra.mxu0 %v402
  %v1089 = vpop.f32.mrf.mxu0
  %v1090 = vadd.f32 0.0, %v1089
  %v1091 = vpop.f32.mrf.mxu0
  %v1092 = vadd.f32 0.0, %v1091
  %1093 = vmatprep.mubr.f32.mxu0 0.0
  %1094 = vmatmul.mubr.f32.gmra.mxu0 %v405
  %v1095 = vpop.f32.mrf.mxu0
  %v1096 = vadd.f32 0.0, %v1095
  %v1097 = vpop.f32.mrf.mxu0
  %v1098 = vadd.f32 0.0, %v1097
  %1099 = vmatprep.mubr.f32.mxu0 0.0
  %1100 = vmatmul.mubr.f32.gmra.mxu0 %v408
  %v1101 = vpop.f32.mrf.mxu0
  %v1102 = vadd.f32 0.0, %v1101
  %v1103 = vpop.f32.mrf.mxu0
  %v1104 = vadd.f32 0.0, %v1103
  %1105 = vmatprep.mubr.f32.mxu0 0.0
  %1106 = vmatmul.mubr.f32.gmra.mxu0 %v411
  %v1107 = vpop.f32.mrf.mxu0
  %v1108 = vadd.f32 0.0, %v1107
  %v1109 = vpop.f32.mrf.mxu0
  %v1110 = vadd.f32 0.0, %v1109
  %1111 = vmatprep.mubr.f32.mxu0 0.0
  %1112 = vmatmul.mubr.f32.gmra.mxu0 %v414
  %v1113 = vpop.f32.mrf.mxu0
  %v1114 = vadd.f32 0.0, %v1113
  %v1115 = vpop.f32.mrf.mxu0
  %v1116 = vadd.f32 0.0, %v1115
  %1117 = vmatprep.mubr.f32.mxu0 0.0
  %1118 = vmatmul.mubr.f32.gmra.mxu0 %v417
  %v1119 = vpop.f32.mrf.mxu0
  %v1120 = vadd.f32 0.0, %v1119
  %v1121 = vpop.f32.mrf.mxu0
  %v1122 = vadd.f32 0.0, %v1121
  %1123 = vmatprep.mubr.f32.mxu0 0.0
  %1124 = vmatmul.mubr.f32.gmra.mxu0 %v420
  %v1125 = vpop.f32.mrf.mxu0
  %v1126 = vadd.f32 0.0, %v1125
  %v1127 = vpop.f32.mrf.mxu0
  %v1128 = vadd.f32 0.0, %v1127
  %1129 = vmatprep.mubr.f32.mxu0 0.0
  %1130 = vmatmul.mubr.f32.gmra.mxu0 %v423
  %v1131 = vpop.f32.mrf.mxu0
  %v1132 = vadd.f32 0.0, %v1131
  %v1133 = vpop.f32.mrf.mxu0
  %v1134 = vadd.f32 0.0, %v1133
  %1135 = vmatprep.mubr.f32.mxu0 0.0
  %1136 = vmatmul.mubr.f32.gmra.mxu0 %v426
  %v1137 = vpop.f32.mrf.mxu0
  %v1138 = vadd.f32 0.0, %v1137
  %v1139 = vpop.f32.mrf.mxu0
  %v1140 = vadd.f32 0.0, %v1139
  %1141 = vmatprep.mubr.f32.mxu0 0.0
  %1142 = vmatmul.mubr.f32.gmra.mxu0 %v429
  %v1143 = vpop.f32.mrf.mxu0
  %v1144 = vadd.f32 0.0, %v1143
  %v1145 = vpop.f32.mrf.mxu0
  %v1146 = vadd.f32 0.0, %v1145
  %1147 = vmatprep.mubr.f32.mxu0 0.0
  %1148 = vmatmul.mubr.f32.gmra.mxu0 %v432
  %v1149 = vpop.f32.mrf.mxu0
  %v1150 = vadd.f32 0.0, %v1149
  %v1151 = vpop.f32.mrf.mxu0
  %v1152 = vadd.f32 0.0, %v1151
  %1153 = vmatprep.mubr.f32.mxu0 0.0
  %1154 = vmatmul.mubr.f32.gmra.mxu0 %v435
  %v1155 = vpop.f32.mrf.mxu0
  %v1156 = vadd.f32 0.0, %v1155
  %v1157 = vpop.f32.mrf.mxu0
  %v1158 = vadd.f32 0.0, %v1157
  %1159 = vmatprep.mubr.f32.mxu0 0.0
  %1160 = vmatmul.mubr.f32.gmra.mxu0 %v438
  %v1161 = vpop.f32.mrf.mxu0
  %v1162 = vadd.f32 0.0, %v1161
  %v1163 = vpop.f32.mrf.mxu0
  %v1164 = vadd.f32 0.0, %v1163
  %1165 = vmatprep.mubr.f32.mxu0 0.0
  %1166 = vmatmul.mubr.f32.gmra.mxu0 %v441
  %v1167 = vpop.f32.mrf.mxu0
  %v1168 = vadd.f32 0.0, %v1167
  %v1169 = vpop.f32.mrf.mxu0
  %v1170 = vadd.f32 0.0, %v1169
  %1171 = vmatprep.mubr.f32.mxu0 0.0
  %1172 = vmatmul.mubr.f32.gmra.mxu0 %v444
  %v1173 = vpop.f32.mrf.mxu0
  %v1174 = vadd.f32 0.0, %v1173
  %v1175 = vpop.f32.mrf.mxu0
  %v1176 = vadd.f32 0.0, %v1175
  %1177 = vmatprep.mubr.f32.mxu0 0.0
  %1178 = vmatmul.mubr.f32.gmra.mxu0 %v447
  %v1179 = vpop.f32.mrf.mxu0
  %v1180 = vadd.f32 0.0, %v1179
  %v1181 = vpop.f32.mrf.mxu0
  %v1182 = vadd.f32 0.0, %v1181
  %1183 = vmatprep.mubr.f32.mxu0 0.0
  %1184 = vmatmul.mubr.f32.gmra.mxu0 %v450
  %v1185 = vpop.f32.mrf.mxu0
  %v1186 = vadd.f32 0.0, %v1185
  %v1187 = vpop.f32.mrf.mxu0
  %v1188 = vadd.f32 0.0, %v1187
  %1189 = vmatprep.mubr.f32.mxu0 0.0
  %1190 = vmatmul.mubr.f32.gmra.mxu0 %v453
  %v1191 = vpop.f32.mrf.mxu0
  %v1192 = vadd.f32 0.0, %v1191
  %v1193 = vpop.f32.mrf.mxu0
  %v1194 = vadd.f32 0.0, %v1193
  %1195 = vmatprep.mubr.f32.mxu0 0.0
  %1196 = vmatmul.mubr.f32.gmra.mxu0 %v456
  %v1197 = vpop.f32.mrf.mxu0
  %v1198 = vadd.f32 0.0, %v1197
  %v1199 = vpop.f32.mrf.mxu0
  %v1200 = vadd.f32 0.0, %v1199
  %1201 = vmatprep.mubr.f32.mxu0 0.0
  %1202 = vmatmul.mubr.f32.gmra.mxu0 %v459
  %v1203 = vpop.f32.mrf.mxu0
  %v1204 = vadd.f32 0.0, %v1203
  %v1205 = vpop.f32.mrf.mxu0
  %v1206 = vadd.f32 0.0, %v1205
  %1207 = vmatprep.mubr.f32.mxu0 0.0
  %1208 = vmatmul.mubr.f32.gmra.mxu0 %v462
  %v1209 = vpop.f32.mrf.mxu0
  %v1210 = vadd.f32 0.0, %v1209
  %v1211 = vpop.f32.mrf.mxu0
  %v1212 = vadd.f32 0.0, %v1211
  %1213 = vmatprep.mubr.f32.mxu0 0.0
  %1214 = vmatmul.mubr.f32.gmra.mxu0 %v465
  %v1215 = vpop.f32.mrf.mxu0
  %v1216 = vadd.f32 0.0, %v1215
  %v1217 = vpop.f32.mrf.mxu0
  %v1218 = vadd.f32 0.0, %v1217
  %1219 = vmatprep.mubr.f32.mxu0 0.0
  %1220 = vmatmul.mubr.f32.gmra.mxu0 %v468
  %v1221 = vpop.f32.mrf.mxu0
  %v1222 = vadd.f32 0.0, %v1221
  %v1223 = vpop.f32.mrf.mxu0
  %v1224 = vadd.f32 0.0, %v1223
  %1225 = vmatprep.mubr.f32.mxu0 0.0
  %1226 = vmatmul.mubr.f32.gmra.mxu0 %v471
  %v1227 = vpop.f32.mrf.mxu0
  %v1228 = vadd.f32 0.0, %v1227
  %v1229 = vpop.f32.mrf.mxu0
  %v1230 = vadd.f32 0.0, %v1229
  %1231 = vmatprep.mubr.f32.mxu0 0.0
  %1232 = vmatmul.mubr.f32.gmra.mxu0 %v474
  %v1233 = vpop.f32.mrf.mxu0
  %v1234 = vadd.f32 0.0, %v1233
  %v1235 = vpop.f32.mrf.mxu0
  %v1236 = vadd.f32 0.0, %v1235
  %1237 = vmatprep.mubr.f32.mxu0 0.0
  %1238 = vmatmul.mubr.f32.gmra.mxu0 %v477
  %v1239 = vpop.f32.mrf.mxu0
  %v1240 = vadd.f32 0.0, %v1239
  %v1241 = vpop.f32.mrf.mxu0
  %v1242 = vadd.f32 0.0, %v1241
  %1243 = vmatprep.mubr.f32.mxu0 0.0
  %1244 = vmatmul.mubr.f32.gmra.mxu0 %v480
  %v1245 = vpop.f32.mrf.mxu0
  %v1246 = vadd.f32 0.0, %v1245
  %v1247 = vpop.f32.mrf.mxu0
  %v1248 = vadd.f32 0.0, %v1247
  %1249 = vmatprep.mubr.f32.mxu0 0.0
  %1250 = vmatmul.mubr.f32.gmra.mxu0 %v483
  %v1251 = vpop.f32.mrf.mxu0
  %v1252 = vadd.f32 0.0, %v1251
  %v1253 = vpop.f32.mrf.mxu0
  %v1254 = vadd.f32 0.0, %v1253
  %1255 = vmatprep.mubr.f32.mxu0 0.0
  %1256 = vmatmul.mubr.f32.gmra.mxu0 %v486
  %v1257 = vpop.f32.mrf.mxu0
  %v1258 = vadd.f32 0.0, %v1257
  %v1259 = vpop.f32.mrf.mxu0
  %v1260 = vadd.f32 0.0, %v1259
  %1261 = vmatprep.mubr.f32.mxu0 0.0
  %1262 = vmatmul.mubr.f32.gmra.mxu0 %v489
  %v1263 = vpop.f32.mrf.mxu0
  %v1264 = vadd.f32 0.0, %v1263
  %v1265 = vpop.f32.mrf.mxu0
  %v1266 = vadd.f32 0.0, %v1265
  %1267 = vmatprep.mubr.f32.mxu0 0.0
  %1268 = vmatmul.mubr.f32.gmra.mxu0 %v492
  %v1269 = vpop.f32.mrf.mxu0
  %v1270 = vadd.f32 0.0, %v1269
  %v1271 = vpop.f32.mrf.mxu0
  %v1272 = vadd.f32 0.0, %v1271
  %1273 = vmatprep.mubr.f32.mxu0 0.0
  %1274 = vmatmul.mubr.f32.gmra.mxu0 %v495
  %v1275 = vpop.f32.mrf.mxu0
  %v1276 = vadd.f32 0.0, %v1275
  %v1277 = vpop.f32.mrf.mxu0
  %v1278 = vadd.f32 0.0, %v1277
  %1279 = vmatprep.mubr.f32.mxu0 0.0
  %1280 = vmatmul.mubr.f32.gmra.mxu0 %v498
  %v1281 = vpop.f32.mrf.mxu0
  %v1282 = vadd.f32 0.0, %v1281
  %v1283 = vpop.f32.mrf.mxu0
  %v1284 = vadd.f32 0.0, %v1283
  %1285 = vmatprep.mubr.f32.mxu0 0.0
  %1286 = vmatmul.mubr.f32.gmra.mxu0 %v501
  %v1287 = vpop.f32.mrf.mxu0
  %v1288 = vadd.f32 0.0, %v1287
  %v1289 = vpop.f32.mrf.mxu0
  %v1290 = vadd.f32 0.0, %v1289
  %1291 = vmatprep.mubr.f32.mxu0 0.0
  %1292 = vmatmul.mubr.f32.gmra.mxu0 %v504
  %v1293 = vpop.f32.mrf.mxu0
  %v1294 = vadd.f32 0.0, %v1293
  %v1295 = vpop.f32.mrf.mxu0
  %v1296 = vadd.f32 0.0, %v1295
  %1297 = vdwg.mxu0
  %v1298 = vxor.u32 %v580, 2147483648
  %v1299 = vxor.u32 %v582, 2147483648
  %v1300 = vxor.u32 %v586, 2147483648
  %v1301 = vxor.u32 %v588, 2147483648
  %v1302 = vxor.u32 %v592, 2147483648
  %v1303 = vxor.u32 %v594, 2147483648
  %v1304 = vxor.u32 %v598, 2147483648
  %v1305 = vxor.u32 %v600, 2147483648
  %v1306 = vxor.u32 %v604, 2147483648
  %v1307 = vxor.u32 %v606, 2147483648
  %v1308 = vxor.u32 %v610, 2147483648
  %v1309 = vxor.u32 %v612, 2147483648
  %v1310 = vxor.u32 %v616, 2147483648
  %v1311 = vxor.u32 %v618, 2147483648
  %v1312 = vxor.u32 %v622, 2147483648
  %v1313 = vxor.u32 %v624, 2147483648
  %v1314 = vxor.u32 %v628, 2147483648
  %v1315 = vxor.u32 %v630, 2147483648
  %v1316 = vxor.u32 %v634, 2147483648
  %v1317 = vxor.u32 %v636, 2147483648
  %v1318 = vxor.u32 %v640, 2147483648
  %v1319 = vxor.u32 %v642, 2147483648
  %v1320 = vxor.u32 %v646, 2147483648
  %v1321 = vxor.u32 %v648, 2147483648
  %v1322 = vxor.u32 %v652, 2147483648
  %v1323 = vxor.u32 %v654, 2147483648
  %v1324 = vxor.u32 %v658, 2147483648
  %v1325 = vxor.u32 %v660, 2147483648
  %v1326 = vxor.u32 %v664, 2147483648
  %v1327 = vxor.u32 %v666, 2147483648
  %v1328 = vxor.u32 %v670, 2147483648
  %v1329 = vxor.u32 %v672, 2147483648
  %v1330 = vxor.u32 %v676, 2147483648
  %v1331 = vxor.u32 %v678, 2147483648
  %v1332 = vxor.u32 %v682, 2147483648
  %v1333 = vxor.u32 %v684, 2147483648
  %v1334 = vxor.u32 %v688, 2147483648
  %v1335 = vxor.u32 %v690, 2147483648
  %v1336 = vxor.u32 %v694, 2147483648
  %v1337 = vxor.u32 %v696, 2147483648
  %v1338 = vxor.u32 %v700, 2147483648
  %v1339 = vxor.u32 %v702, 2147483648
  %v1340 = vxor.u32 %v706, 2147483648
  %v1341 = vxor.u32 %v708, 2147483648
  %v1342 = vxor.u32 %v712, 2147483648
  %v1343 = vxor.u32 %v714, 2147483648
  %v1344 = vxor.u32 %v718, 2147483648
  %v1345 = vxor.u32 %v720, 2147483648
  %v1346 = vxor.u32 %v724, 2147483648
  %v1347 = vxor.u32 %v726, 2147483648
  %v1348 = vxor.u32 %v730, 2147483648
  %v1349 = vxor.u32 %v732, 2147483648
  %v1350 = vxor.u32 %v736, 2147483648
  %v1351 = vxor.u32 %v738, 2147483648
  %v1352 = vxor.u32 %v742, 2147483648
  %v1353 = vxor.u32 %v744, 2147483648
  %v1354 = vxor.u32 %v748, 2147483648
  %v1355 = vxor.u32 %v750, 2147483648
  %v1356 = vxor.u32 %v754, 2147483648
  %v1357 = vxor.u32 %v756, 2147483648
  %v1358 = vxor.u32 %v760, 2147483648
  %v1359 = vxor.u32 %v762, 2147483648
  %v1360 = vxor.u32 %v766, 2147483648
  %v1361 = vxor.u32 %v768, 2147483648
  %v1362 = vxor.u32 %v772, 2147483648
  %v1363 = vxor.u32 %v774, 2147483648
  %v1364 = vxor.u32 %v778, 2147483648
  %v1365 = vxor.u32 %v780, 2147483648
  %v1366 = vxor.u32 %v784, 2147483648
  %v1367 = vxor.u32 %v786, 2147483648
  %v1368 = vxor.u32 %v790, 2147483648
  %v1369 = vxor.u32 %v792, 2147483648
  %v1370 = vxor.u32 %v796, 2147483648
  %v1371 = vxor.u32 %v798, 2147483648
  %v1372 = vxor.u32 %v802, 2147483648
  %v1373 = vxor.u32 %v804, 2147483648
  %v1374 = vxor.u32 %v808, 2147483648
  %v1375 = vxor.u32 %v810, 2147483648
  %v1376 = vxor.u32 %v814, 2147483648
  %v1377 = vxor.u32 %v816, 2147483648
  %v1378 = vxor.u32 %v820, 2147483648
  %v1379 = vxor.u32 %v822, 2147483648
  %v1380 = vxor.u32 %v826, 2147483648
  %v1381 = vxor.u32 %v828, 2147483648
  %v1382 = vxor.u32 %v832, 2147483648
  %v1383 = vxor.u32 %v834, 2147483648
  %v1384 = vxor.u32 %v838, 2147483648
  %v1385 = vxor.u32 %v840, 2147483648
  %v1386 = vxor.u32 %v844, 2147483648
  %v1387 = vxor.u32 %v846, 2147483648
  %v1388 = vxor.u32 %v850, 2147483648
  %v1389 = vxor.u32 %v852, 2147483648
  %v1390 = vxor.u32 %v856, 2147483648
  %v1391 = vxor.u32 %v858, 2147483648
  %v1392 = vxor.u32 %v862, 2147483648
  %v1393 = vxor.u32 %v864, 2147483648
  %v1394 = vxor.u32 %v868, 2147483648
  %v1395 = vxor.u32 %v870, 2147483648
  %v1396 = vxor.u32 %v874, 2147483648
  %v1397 = vxor.u32 %v876, 2147483648
  %v1398 = vxor.u32 %v880, 2147483648
  %v1399 = vxor.u32 %v882, 2147483648
  %v1400 = vxor.u32 %v886, 2147483648
  %v1401 = vxor.u32 %v888, 2147483648
  %v1402 = vxor.u32 %v892, 2147483648
  %v1403 = vxor.u32 %v894, 2147483648
  %v1404 = vxor.u32 %v898, 2147483648
  %v1405 = vxor.u32 %v900, 2147483648
  %v1406 = vxor.u32 %v904, 2147483648
  %v1407 = vxor.u32 %v906, 2147483648
  %v1408 = vxor.u32 %v910, 2147483648
  %v1409 = vxor.u32 %v912, 2147483648
  %v1410 = vxor.u32 %v916, 2147483648
  %v1411 = vxor.u32 %v918, 2147483648
  %v1412 = vxor.u32 %v922, 2147483648
  %v1413 = vxor.u32 %v924, 2147483648
  %v1414 = vxor.u32 %v928, 2147483648
  %v1415 = vxor.u32 %v930, 2147483648
  %v1416 = vxor.u32 %v934, 2147483648
  %v1417 = vxor.u32 %v936, 2147483648
  %v1418 = vxor.u32 %v940, 2147483648
  %v1419 = vxor.u32 %v942, 2147483648
  %v1420 = vxor.u32 %v946, 2147483648
  %v1421 = vxor.u32 %v948, 2147483648
  %v1422 = vxor.u32 %v952, 2147483648
  %v1423 = vxor.u32 %v954, 2147483648
  %v1424 = vxor.u32 %v958, 2147483648
  %v1425 = vxor.u32 %v960, 2147483648
  %v1426 = vxor.u32 %v964, 2147483648
  %v1427 = vxor.u32 %v966, 2147483648
  %v1428 = vxor.u32 %v970, 2147483648
  %v1429 = vxor.u32 %v972, 2147483648
  %v1430 = vxor.u32 %v976, 2147483648
  %v1431 = vxor.u32 %v978, 2147483648
  %v1432 = vxor.u32 %v982, 2147483648
  %v1433 = vxor.u32 %v984, 2147483648
  %v1434 = vxor.u32 %v988, 2147483648
  %v1435 = vxor.u32 %v990, 2147483648
  %v1436 = vxor.u32 %v994, 2147483648
  %v1437 = vxor.u32 %v996, 2147483648
  %v1438 = vxor.u32 %v1000, 2147483648
  %v1439 = vxor.u32 %v1002, 2147483648
  %v1440 = vxor.u32 %v1006, 2147483648
  %v1441 = vxor.u32 %v1008, 2147483648
  %v1442 = vxor.u32 %v1012, 2147483648
  %v1443 = vxor.u32 %v1014, 2147483648
  %v1444 = vxor.u32 %v1018, 2147483648
  %v1445 = vxor.u32 %v1020, 2147483648
  %v1446 = vxor.u32 %v1024, 2147483648
  %v1447 = vxor.u32 %v1026, 2147483648
  %v1448 = vxor.u32 %v1030, 2147483648
  %v1449 = vxor.u32 %v1032, 2147483648
  %v1450 = vxor.u32 %v1036, 2147483648
  %v1451 = vxor.u32 %v1038, 2147483648
  %v1452 = vxor.u32 %v1042, 2147483648
  %v1453 = vxor.u32 %v1044, 2147483648
  %v1454 = vxor.u32 %v1048, 2147483648
  %v1455 = vxor.u32 %v1050, 2147483648
  %v1456 = vxor.u32 %v1054, 2147483648
  %v1457 = vxor.u32 %v1056, 2147483648
  %v1458 = vxor.u32 %v1060, 2147483648
  %v1459 = vxor.u32 %v1062, 2147483648
  %v1460 = vxor.u32 %v1066, 2147483648
  %v1461 = vxor.u32 %v1068, 2147483648
  %v1462 = vxor.u32 %v1072, 2147483648
  %v1463 = vxor.u32 %v1074, 2147483648
  %v1464 = vxor.u32 %v1078, 2147483648
  %v1465 = vxor.u32 %v1080, 2147483648
  %v1466 = vxor.u32 %v1084, 2147483648
  %v1467 = vxor.u32 %v1086, 2147483648
  %v1468 = vxor.u32 %v1090, 2147483648
  %v1469 = vxor.u32 %v1092, 2147483648
  %v1470 = vxor.u32 %v1096, 2147483648
  %v1471 = vxor.u32 %v1098, 2147483648
  %v1472 = vxor.u32 %v1102, 2147483648
  %v1473 = vxor.u32 %v1104, 2147483648
  %v1474 = vxor.u32 %v1108, 2147483648
  %v1475 = vxor.u32 %v1110, 2147483648
  %v1476 = vxor.u32 %v1114, 2147483648
  %v1477 = vxor.u32 %v1116, 2147483648
  %v1478 = vxor.u32 %v1120, 2147483648
  %v1479 = vxor.u32 %v1122, 2147483648
  %v1480 = vxor.u32 %v1126, 2147483648
  %v1481 = vxor.u32 %v1128, 2147483648
  %v1482 = vxor.u32 %v1132, 2147483648
  %v1483 = vxor.u32 %v1134, 2147483648
  %v1484 = vxor.u32 %v1138, 2147483648
  %v1485 = vxor.u32 %v1140, 2147483648
  %v1486 = vxor.u32 %v1144, 2147483648
  %v1487 = vxor.u32 %v1146, 2147483648
  %v1488 = vxor.u32 %v1150, 2147483648
  %v1489 = vxor.u32 %v1152, 2147483648
  %v1490 = vxor.u32 %v1156, 2147483648
  %v1491 = vxor.u32 %v1158, 2147483648
  %v1492 = vxor.u32 %v1162, 2147483648
  %v1493 = vxor.u32 %v1164, 2147483648
  %v1494 = vxor.u32 %v1168, 2147483648
  %v1495 = vxor.u32 %v1170, 2147483648
  %v1496 = vxor.u32 %v1174, 2147483648
  %v1497 = vxor.u32 %v1176, 2147483648
  %v1498 = vxor.u32 %v1180, 2147483648
  %v1499 = vxor.u32 %v1182, 2147483648
  %v1500 = vxor.u32 %v1186, 2147483648
  %v1501 = vxor.u32 %v1188, 2147483648
  %v1502 = vxor.u32 %v1192, 2147483648
  %v1503 = vxor.u32 %v1194, 2147483648
  %v1504 = vxor.u32 %v1198, 2147483648
  %v1505 = vxor.u32 %v1200, 2147483648
  %v1506 = vxor.u32 %v1204, 2147483648
  %v1507 = vxor.u32 %v1206, 2147483648
  %v1508 = vxor.u32 %v1210, 2147483648
  %v1509 = vxor.u32 %v1212, 2147483648
  %v1510 = vxor.u32 %v1216, 2147483648
  %v1511 = vxor.u32 %v1218, 2147483648
  %v1512 = vxor.u32 %v1222, 2147483648
  %v1513 = vxor.u32 %v1224, 2147483648
  %v1514 = vxor.u32 %v1228, 2147483648
  %v1515 = vxor.u32 %v1230, 2147483648
  %v1516 = vxor.u32 %v1234, 2147483648
  %v1517 = vxor.u32 %v1236, 2147483648
  %v1518 = vxor.u32 %v1240, 2147483648
  %v1519 = vxor.u32 %v1242, 2147483648
  %v1520 = vxor.u32 %v1246, 2147483648
  %v1521 = vxor.u32 %v1248, 2147483648
  %v1522 = vxor.u32 %v1252, 2147483648
  %v1523 = vxor.u32 %v1254, 2147483648
  %v1524 = vxor.u32 %v1258, 2147483648
  %v1525 = vxor.u32 %v1260, 2147483648
  %v1526 = vxor.u32 %v1264, 2147483648
  %v1527 = vxor.u32 %v1266, 2147483648
  %v1528 = vxor.u32 %v1270, 2147483648
  %v1529 = vxor.u32 %v1272, 2147483648
  %v1530 = vxor.u32 %v1276, 2147483648
  %v1531 = vxor.u32 %v1278, 2147483648
  %v1532 = vxor.u32 %v1282, 2147483648
  %v1533 = vxor.u32 %v1284, 2147483648
  %v1534 = vxor.u32 %v1288, 2147483648
  %v1535 = vxor.u32 %v1290, 2147483648
  %v1536 = vxor.u32 %v1294, 2147483648
  %v1537 = vxor.u32 %v1296, 2147483648
  %v1538 = vmul.f32 %v1298, 1.442695
  %v1539 = vpow.pop %v1538
  %v1540 = vmul.f32 %v1299, 1.442695
  %v1541 = vpow.pop %v1540
  %v1542 = vmul.f32 %v1300, 1.442695
  %v1543 = vpow.pop %v1542
  %v1544 = vmul.f32 %v1301, 1.442695
  %v1545 = vpow.pop %v1544
  %v1546 = vmul.f32 %v1302, 1.442695
  %v1547 = vpow.pop %v1546
  %v1548 = vmul.f32 %v1303, 1.442695
  %v1549 = vpow.pop %v1548
  %v1550 = vmul.f32 %v1304, 1.442695
  %v1551 = vpow.pop %v1550
  %v1552 = vmul.f32 %v1305, 1.442695
  %v1553 = vpow.pop %v1552
  %v1554 = vmul.f32 %v1306, 1.442695
  %v1555 = vpow.pop %v1554
  %v1556 = vmul.f32 %v1307, 1.442695
  %v1557 = vpow.pop %v1556
  %v1558 = vmul.f32 %v1308, 1.442695
  %v1559 = vpow.pop %v1558
  %v1560 = vmul.f32 %v1309, 1.442695
  %v1561 = vpow.pop %v1560
  %v1562 = vmul.f32 %v1310, 1.442695
  %v1563 = vpow.pop %v1562
  %v1564 = vmul.f32 %v1311, 1.442695
  %v1565 = vpow.pop %v1564
  %v1566 = vmul.f32 %v1312, 1.442695
  %v1567 = vpow.pop %v1566
  %v1568 = vmul.f32 %v1313, 1.442695
  %v1569 = vpow.pop %v1568
  %v1570 = vmul.f32 %v1314, 1.442695
  %v1571 = vpow.pop %v1570
  %v1572 = vmul.f32 %v1315, 1.442695
  %v1573 = vpow.pop %v1572
  %v1574 = vmul.f32 %v1316, 1.442695
  %v1575 = vpow.pop %v1574
  %v1576 = vmul.f32 %v1317, 1.442695
  %v1577 = vpow.pop %v1576
  %v1578 = vmul.f32 %v1318, 1.442695
  %v1579 = vpow.pop %v1578
  %v1580 = vmul.f32 %v1319, 1.442695
  %v1581 = vpow.pop %v1580
  %v1582 = vmul.f32 %v1320, 1.442695
  %v1583 = vpow.pop %v1582
  %v1584 = vmul.f32 %v1321, 1.442695
  %v1585 = vpow.pop %v1584
  %v1586 = vmul.f32 %v1322, 1.442695
  %v1587 = vpow.pop %v1586
  %v1588 = vmul.f32 %v1323, 1.442695
  %v1589 = vpow.pop %v1588
  %v1590 = vmul.f32 %v1324, 1.442695
  %v1591 = vpow.pop %v1590
  %v1592 = vmul.f32 %v1325, 1.442695
  %v1593 = vpow.pop %v1592
  %v1594 = vmul.f32 %v1326, 1.442695
  %v1595 = vpow.pop %v1594
  %v1596 = vmul.f32 %v1327, 1.442695
  %v1597 = vpow.pop %v1596
  %v1598 = vmul.f32 %v1328, 1.442695
  %v1599 = vpow.pop %v1598
  %v1600 = vmul.f32 %v1329, 1.442695
  %v1601 = vpow.pop %v1600
  %v1602 = vmul.f32 %v1330, 1.442695
  %v1603 = vpow.pop %v1602
  %v1604 = vmul.f32 %v1331, 1.442695
  %v1605 = vpow.pop %v1604
  %v1606 = vmul.f32 %v1332, 1.442695
  %v1607 = vpow.pop %v1606
  %v1608 = vmul.f32 %v1333, 1.442695
  %v1609 = vpow.pop %v1608
  %v1610 = vmul.f32 %v1334, 1.442695
  %v1611 = vpow.pop %v1610
  %v1612 = vmul.f32 %v1335, 1.442695
  %v1613 = vpow.pop %v1612
  %v1614 = vmul.f32 %v1336, 1.442695
  %v1615 = vpow.pop %v1614
  %v1616 = vmul.f32 %v1337, 1.442695
  %v1617 = vpow.pop %v1616
  %v1618 = vmul.f32 %v1338, 1.442695
  %v1619 = vpow.pop %v1618
  %v1620 = vmul.f32 %v1339, 1.442695
  %v1621 = vpow.pop %v1620
  %v1622 = vmul.f32 %v1340, 1.442695
  %v1623 = vpow.pop %v1622
  %v1624 = vmul.f32 %v1341, 1.442695
  %v1625 = vpow.pop %v1624
  %v1626 = vmul.f32 %v1342, 1.442695
  %v1627 = vpow.pop %v1626
  %v1628 = vmul.f32 %v1343, 1.442695
  %v1629 = vpow.pop %v1628
  %v1630 = vmul.f32 %v1344, 1.442695
  %v1631 = vpow.pop %v1630
  %v1632 = vmul.f32 %v1345, 1.442695
  %v1633 = vpow.pop %v1632
  %v1634 = vmul.f32 %v1346, 1.442695
  %v1635 = vpow.pop %v1634
  %v1636 = vmul.f32 %v1347, 1.442695
  %v1637 = vpow.pop %v1636
  %v1638 = vmul.f32 %v1348, 1.442695
  %v1639 = vpow.pop %v1638
  %v1640 = vmul.f32 %v1349, 1.442695
  %v1641 = vpow.pop %v1640
  %v1642 = vmul.f32 %v1350, 1.442695
  %v1643 = vpow.pop %v1642
  %v1644 = vmul.f32 %v1351, 1.442695
  %v1645 = vpow.pop %v1644
  %v1646 = vmul.f32 %v1352, 1.442695
  %v1647 = vpow.pop %v1646
  %v1648 = vmul.f32 %v1353, 1.442695
  %v1649 = vpow.pop %v1648
  %v1650 = vmul.f32 %v1354, 1.442695
  %v1651 = vpow.pop %v1650
  %v1652 = vmul.f32 %v1355, 1.442695
  %v1653 = vpow.pop %v1652
  %v1654 = vmul.f32 %v1356, 1.442695
  %v1655 = vpow.pop %v1654
  %v1656 = vmul.f32 %v1357, 1.442695
  %v1657 = vpow.pop %v1656
  %v1658 = vmul.f32 %v1358, 1.442695
  %v1659 = vpow.pop %v1658
  %v1660 = vmul.f32 %v1359, 1.442695
  %v1661 = vpow.pop %v1660
  %v1662 = vmul.f32 %v1360, 1.442695
  %v1663 = vpow.pop %v1662
  %v1664 = vmul.f32 %v1361, 1.442695
  %v1665 = vpow.pop %v1664
  %v1666 = vmul.f32 %v1362, 1.442695
  %v1667 = vpow.pop %v1666
  %v1668 = vmul.f32 %v1363, 1.442695
  %v1669 = vpow.pop %v1668
  %v1670 = vmul.f32 %v1364, 1.442695
  %v1671 = vpow.pop %v1670
  %v1672 = vmul.f32 %v1365, 1.442695
  %v1673 = vpow.pop %v1672
  %v1674 = vmul.f32 %v1366, 1.442695
  %v1675 = vpow.pop %v1674
  %v1676 = vmul.f32 %v1367, 1.442695
  %v1677 = vpow.pop %v1676
  %v1678 = vmul.f32 %v1368, 1.442695
  %v1679 = vpow.pop %v1678
  %v1680 = vmul.f32 %v1369, 1.442695
  %v1681 = vpow.pop %v1680
  %v1682 = vmul.f32 %v1370, 1.442695
  %v1683 = vpow.pop %v1682
  %v1684 = vmul.f32 %v1371, 1.442695
  %v1685 = vpow.pop %v1684
  %v1686 = vmul.f32 %v1372, 1.442695
  %v1687 = vpow.pop %v1686
  %v1688 = vmul.f32 %v1373, 1.442695
  %v1689 = vpow.pop %v1688
  %v1690 = vmul.f32 %v1374, 1.442695
  %v1691 = vpow.pop %v1690
  %v1692 = vmul.f32 %v1375, 1.442695
  %v1693 = vpow.pop %v1692
  %v1694 = vmul.f32 %v1376, 1.442695
  %v1695 = vpow.pop %v1694
  %v1696 = vmul.f32 %v1377, 1.442695
  %v1697 = vpow.pop %v1696
  %v1698 = vmul.f32 %v1378, 1.442695
  %v1699 = vpow.pop %v1698
  %v1700 = vmul.f32 %v1379, 1.442695
  %v1701 = vpow.pop %v1700
  %v1702 = vmul.f32 %v1380, 1.442695
  %v1703 = vpow.pop %v1702
  %v1704 = vmul.f32 %v1381, 1.442695
  %v1705 = vpow.pop %v1704
  %v1706 = vmul.f32 %v1382, 1.442695
  %v1707 = vpow.pop %v1706
  %v1708 = vmul.f32 %v1383, 1.442695
  %v1709 = vpow.pop %v1708
  %v1710 = vmul.f32 %v1384, 1.442695
  %v1711 = vpow.pop %v1710
  %v1712 = vmul.f32 %v1385, 1.442695
  %v1713 = vpow.pop %v1712
  %v1714 = vmul.f32 %v1386, 1.442695
  %v1715 = vpow.pop %v1714
  %v1716 = vmul.f32 %v1387, 1.442695
  %v1717 = vpow.pop %v1716
  %v1718 = vmul.f32 %v1388, 1.442695
  %v1719 = vpow.pop %v1718
  %v1720 = vmul.f32 %v1389, 1.442695
  %v1721 = vpow.pop %v1720
  %v1722 = vmul.f32 %v1390, 1.442695
  %v1723 = vpow.pop %v1722
  %v1724 = vmul.f32 %v1391, 1.442695
  %v1725 = vpow.pop %v1724
  %v1726 = vmul.f32 %v1392, 1.442695
  %v1727 = vpow.pop %v1726
  %v1728 = vmul.f32 %v1393, 1.442695
  %v1729 = vpow.pop %v1728
  %v1730 = vmul.f32 %v1394, 1.442695
  %v1731 = vpow.pop %v1730
  %v1732 = vmul.f32 %v1395, 1.442695
  %v1733 = vpow.pop %v1732
  %v1734 = vmul.f32 %v1396, 1.442695
  %v1735 = vpow.pop %v1734
  %v1736 = vmul.f32 %v1397, 1.442695
  %v1737 = vpow.pop %v1736
  %v1738 = vmul.f32 %v1398, 1.442695
  %v1739 = vpow.pop %v1738
  %v1740 = vmul.f32 %v1399, 1.442695
  %v1741 = vpow.pop %v1740
  %v1742 = vmul.f32 %v1400, 1.442695
  %v1743 = vpow.pop %v1742
  %v1744 = vmul.f32 %v1401, 1.442695
  %v1745 = vpow.pop %v1744
  %v1746 = vmul.f32 %v1402, 1.442695
  %v1747 = vpow.pop %v1746
  %v1748 = vmul.f32 %v1403, 1.442695
  %v1749 = vpow.pop %v1748
  %v1750 = vmul.f32 %v1404, 1.442695
  %v1751 = vpow.pop %v1750
  %v1752 = vmul.f32 %v1405, 1.442695
  %v1753 = vpow.pop %v1752
  %v1754 = vmul.f32 %v1406, 1.442695
  %v1755 = vpow.pop %v1754
  %v1756 = vmul.f32 %v1407, 1.442695
  %v1757 = vpow.pop %v1756
  %v1758 = vmul.f32 %v1408, 1.442695
  %v1759 = vpow.pop %v1758
  %v1760 = vmul.f32 %v1409, 1.442695
  %v1761 = vpow.pop %v1760
  %v1762 = vmul.f32 %v1410, 1.442695
  %v1763 = vpow.pop %v1762
  %v1764 = vmul.f32 %v1411, 1.442695
  %v1765 = vpow.pop %v1764
  %v1766 = vmul.f32 %v1412, 1.442695
  %v1767 = vpow.pop %v1766
  %v1768 = vmul.f32 %v1413, 1.442695
  %v1769 = vpow.pop %v1768
  %v1770 = vmul.f32 %v1414, 1.442695
  %v1771 = vpow.pop %v1770
  %v1772 = vmul.f32 %v1415, 1.442695
  %v1773 = vpow.pop %v1772
  %v1774 = vmul.f32 %v1416, 1.442695
  %v1775 = vpow.pop %v1774
  %v1776 = vmul.f32 %v1417, 1.442695
  %v1777 = vpow.pop %v1776
  %v1778 = vmul.f32 %v1418, 1.442695
  %v1779 = vpow.pop %v1778
  %v1780 = vmul.f32 %v1419, 1.442695
  %v1781 = vpow.pop %v1780
  %v1782 = vmul.f32 %v1420, 1.442695
  %v1783 = vpow.pop %v1782
  %v1784 = vmul.f32 %v1421, 1.442695
  %v1785 = vpow.pop %v1784
  %v1786 = vmul.f32 %v1422, 1.442695
  %v1787 = vpow.pop %v1786
  %v1788 = vmul.f32 %v1423, 1.442695
  %v1789 = vpow.pop %v1788
  %v1790 = vmul.f32 %v1424, 1.442695
  %v1791 = vpow.pop %v1790
  %v1792 = vmul.f32 %v1425, 1.442695
  %v1793 = vpow.pop %v1792
  %v1794 = vmul.f32 %v1426, 1.442695
  %v1795 = vpow.pop %v1794
  %v1796 = vmul.f32 %v1427, 1.442695
  %v1797 = vpow.pop %v1796
  %v1798 = vmul.f32 %v1428, 1.442695
  %v1799 = vpow.pop %v1798
  %v1800 = vmul.f32 %v1429, 1.442695
  %v1801 = vpow.pop %v1800
  %v1802 = vmul.f32 %v1430, 1.442695
  %v1803 = vpow.pop %v1802
  %v1804 = vmul.f32 %v1431, 1.442695
  %v1805 = vpow.pop %v1804
  %v1806 = vmul.f32 %v1432, 1.442695
  %v1807 = vpow.pop %v1806
  %v1808 = vmul.f32 %v1433, 1.442695
  %v1809 = vpow.pop %v1808
  %v1810 = vmul.f32 %v1434, 1.442695
  %v1811 = vpow.pop %v1810
  %v1812 = vmul.f32 %v1435, 1.442695
  %v1813 = vpow.pop %v1812
  %v1814 = vmul.f32 %v1436, 1.442695
  %v1815 = vpow.pop %v1814
  %v1816 = vmul.f32 %v1437, 1.442695
  %v1817 = vpow.pop %v1816
  %v1818 = vmul.f32 %v1438, 1.442695
  %v1819 = vpow.pop %v1818
  %v1820 = vmul.f32 %v1439, 1.442695
  %v1821 = vpow.pop %v1820
  %v1822 = vmul.f32 %v1440, 1.442695
  %v1823 = vpow.pop %v1822
  %v1824 = vmul.f32 %v1441, 1.442695
  %v1825 = vpow.pop %v1824
  %v1826 = vmul.f32 %v1442, 1.442695
  %v1827 = vpow.pop %v1826
  %v1828 = vmul.f32 %v1443, 1.442695
  %v1829 = vpow.pop %v1828
  %v1830 = vmul.f32 %v1444, 1.442695
  %v1831 = vpow.pop %v1830
  %v1832 = vmul.f32 %v1445, 1.442695
  %v1833 = vpow.pop %v1832
  %v1834 = vmul.f32 %v1446, 1.442695
  %v1835 = vpow.pop %v1834
  %v1836 = vmul.f32 %v1447, 1.442695
  %v1837 = vpow.pop %v1836
  %v1838 = vmul.f32 %v1448, 1.442695
  %v1839 = vpow.pop %v1838
  %v1840 = vmul.f32 %v1449, 1.442695
  %v1841 = vpow.pop %v1840
  %v1842 = vmul.f32 %v1450, 1.442695
  %v1843 = vpow.pop %v1842
  %v1844 = vmul.f32 %v1451, 1.442695
  %v1845 = vpow.pop %v1844
  %v1846 = vmul.f32 %v1452, 1.442695
  %v1847 = vpow.pop %v1846
  %v1848 = vmul.f32 %v1453, 1.442695
  %v1849 = vpow.pop %v1848
  %v1850 = vmul.f32 %v1454, 1.442695
  %v1851 = vpow.pop %v1850
  %v1852 = vmul.f32 %v1455, 1.442695
  %v1853 = vpow.pop %v1852
  %v1854 = vmul.f32 %v1456, 1.442695
  %v1855 = vpow.pop %v1854
  %v1856 = vmul.f32 %v1457, 1.442695
  %v1857 = vpow.pop %v1856
  %v1858 = vmul.f32 %v1458, 1.442695
  %v1859 = vpow.pop %v1858
  %v1860 = vmul.f32 %v1459, 1.442695
  %v1861 = vpow.pop %v1860
  %v1862 = vmul.f32 %v1460, 1.442695
  %v1863 = vpow.pop %v1862
  %v1864 = vmul.f32 %v1461, 1.442695
  %v1865 = vpow.pop %v1864
  %v1866 = vmul.f32 %v1462, 1.442695
  %v1867 = vpow.pop %v1866
  %v1868 = vmul.f32 %v1463, 1.442695
  %v1869 = vpow.pop %v1868
  %v1870 = vmul.f32 %v1464, 1.442695
  %v1871 = vpow.pop %v1870
  %v1872 = vmul.f32 %v1465, 1.442695
  %v1873 = vpow.pop %v1872
  %v1874 = vmul.f32 %v1466, 1.442695
  %v1875 = vpow.pop %v1874
  %v1876 = vmul.f32 %v1467, 1.442695
  %v1877 = vpow.pop %v1876
  %v1878 = vmul.f32 %v1468, 1.442695
  %v1879 = vpow.pop %v1878
  %v1880 = vmul.f32 %v1469, 1.442695
  %v1881 = vpow.pop %v1880
  %v1882 = vmul.f32 %v1470, 1.442695
  %v1883 = vpow.pop %v1882
  %v1884 = vmul.f32 %v1471, 1.442695
  %v1885 = vpow.pop %v1884
  %v1886 = vmul.f32 %v1472, 1.442695
  %v1887 = vpow.pop %v1886
  %v1888 = vmul.f32 %v1473, 1.442695
  %v1889 = vpow.pop %v1888
  %v1890 = vmul.f32 %v1474, 1.442695
  %v1891 = vpow.pop %v1890
  %v1892 = vmul.f32 %v1475, 1.442695
  %v1893 = vpow.pop %v1892
  %v1894 = vmul.f32 %v1476, 1.442695
  %v1895 = vpow.pop %v1894
  %v1896 = vmul.f32 %v1477, 1.442695
  %v1897 = vpow.pop %v1896
  %v1898 = vmul.f32 %v1478, 1.442695
  %v1899 = vpow.pop %v1898
  %v1900 = vmul.f32 %v1479, 1.442695
  %v1901 = vpow.pop %v1900
  %v1902 = vmul.f32 %v1480, 1.442695
  %v1903 = vpow.pop %v1902
  %v1904 = vmul.f32 %v1481, 1.442695
  %v1905 = vpow.pop %v1904
  %v1906 = vmul.f32 %v1482, 1.442695
  %v1907 = vpow.pop %v1906
  %v1908 = vmul.f32 %v1483, 1.442695
  %v1909 = vpow.pop %v1908
  %v1910 = vmul.f32 %v1484, 1.442695
  %v1911 = vpow.pop %v1910
  %v1912 = vmul.f32 %v1485, 1.442695
  %v1913 = vpow.pop %v1912
  %v1914 = vmul.f32 %v1486, 1.442695
  %v1915 = vpow.pop %v1914
  %v1916 = vmul.f32 %v1487, 1.442695
  %v1917 = vpow.pop %v1916
  %v1918 = vmul.f32 %v1488, 1.442695
  %v1919 = vpow.pop %v1918
  %v1920 = vmul.f32 %v1489, 1.442695
  %v1921 = vpow.pop %v1920
  %v1922 = vmul.f32 %v1490, 1.442695
  %v1923 = vpow.pop %v1922
  %v1924 = vmul.f32 %v1491, 1.442695
  %v1925 = vpow.pop %v1924
  %v1926 = vmul.f32 %v1492, 1.442695
  %v1927 = vpow.pop %v1926
  %v1928 = vmul.f32 %v1493, 1.442695
  %v1929 = vpow.pop %v1928
  %v1930 = vmul.f32 %v1494, 1.442695
  %v1931 = vpow.pop %v1930
  %v1932 = vmul.f32 %v1495, 1.442695
  %v1933 = vpow.pop %v1932
  %v1934 = vmul.f32 %v1496, 1.442695
  %v1935 = vpow.pop %v1934
  %v1936 = vmul.f32 %v1497, 1.442695
  %v1937 = vpow.pop %v1936
  %v1938 = vmul.f32 %v1498, 1.442695
  %v1939 = vpow.pop %v1938
  %v1940 = vmul.f32 %v1499, 1.442695
  %v1941 = vpow.pop %v1940
  %v1942 = vmul.f32 %v1500, 1.442695
  %v1943 = vpow.pop %v1942
  %v1944 = vmul.f32 %v1501, 1.442695
  %v1945 = vpow.pop %v1944
  %v1946 = vmul.f32 %v1502, 1.442695
  %v1947 = vpow.pop %v1946
  %v1948 = vmul.f32 %v1503, 1.442695
  %v1949 = vpow.pop %v1948
  %v1950 = vmul.f32 %v1504, 1.442695
  %v1951 = vpow.pop %v1950
  %v1952 = vmul.f32 %v1505, 1.442695
  %v1953 = vpow.pop %v1952
  %v1954 = vmul.f32 %v1506, 1.442695
  %v1955 = vpow.pop %v1954
  %v1956 = vmul.f32 %v1507, 1.442695
  %v1957 = vpow.pop %v1956
  %v1958 = vmul.f32 %v1508, 1.442695
  %v1959 = vpow.pop %v1958
  %v1960 = vmul.f32 %v1509, 1.442695
  %v1961 = vpow.pop %v1960
  %v1962 = vmul.f32 %v1510, 1.442695
  %v1963 = vpow.pop %v1962
  %v1964 = vmul.f32 %v1511, 1.442695
  %v1965 = vpow.pop %v1964
  %v1966 = vmul.f32 %v1512, 1.442695
  %v1967 = vpow.pop %v1966
  %v1968 = vmul.f32 %v1513, 1.442695
  %v1969 = vpow.pop %v1968
  %v1970 = vmul.f32 %v1514, 1.442695
  %v1971 = vpow.pop %v1970
  %v1972 = vmul.f32 %v1515, 1.442695
  %v1973 = vpow.pop %v1972
  %v1974 = vmul.f32 %v1516, 1.442695
  %v1975 = vpow.pop %v1974
  %v1976 = vmul.f32 %v1517, 1.442695
  %v1977 = vpow.pop %v1976
  %v1978 = vmul.f32 %v1518, 1.442695
  %v1979 = vpow.pop %v1978
  %v1980 = vmul.f32 %v1519, 1.442695
  %v1981 = vpow.pop %v1980
  %v1982 = vmul.f32 %v1520, 1.442695
  %v1983 = vpow.pop %v1982
  %v1984 = vmul.f32 %v1521, 1.442695
  %v1985 = vpow.pop %v1984
  %v1986 = vmul.f32 %v1522, 1.442695
  %v1987 = vpow.pop %v1986
  %v1988 = vmul.f32 %v1523, 1.442695
  %v1989 = vpow.pop %v1988
  %v1990 = vmul.f32 %v1524, 1.442695
  %v1991 = vpow.pop %v1990
  %v1992 = vmul.f32 %v1525, 1.442695
  %v1993 = vpow.pop %v1992
  %v1994 = vmul.f32 %v1526, 1.442695
  %v1995 = vpow.pop %v1994
  %v1996 = vmul.f32 %v1527, 1.442695
  %v1997 = vpow.pop %v1996
  %v1998 = vmul.f32 %v1528, 1.442695
  %v1999 = vpow.pop %v1998
  %v2000 = vmul.f32 %v1529, 1.442695
  %v2001 = vpow.pop %v2000
  %v2002 = vmul.f32 %v1530, 1.442695
  %v2003 = vpow.pop %v2002
  %v2004 = vmul.f32 %v1531, 1.442695
  %v2005 = vpow.pop %v2004
  %v2006 = vmul.f32 %v1532, 1.442695
  %v2007 = vpow.pop %v2006
  %v2008 = vmul.f32 %v1533, 1.442695
  %v2009 = vpow.pop %v2008
  %v2010 = vmul.f32 %v1534, 1.442695
  %v2011 = vpow.pop %v2010
  %v2012 = vmul.f32 %v1535, 1.442695
  %v2013 = vpow.pop %v2012
  %v2014 = vmul.f32 %v1536, 1.442695
  %v2015 = vpow.pop %v2014
  %v2016 = vmul.f32 %v1537, 1.442695
  %v2017 = vpow.pop %v2016
  %v2018 = vadd.f32 %v1539, 1.0
  %v2019 = vadd.f32 %v1541, 1.0
  %v2020 = vadd.f32 %v1543, 1.0
  %v2021 = vadd.f32 %v1545, 1.0
  %v2022 = vadd.f32 %v1547, 1.0
  %v2023 = vadd.f32 %v1549, 1.0
  %v2024 = vadd.f32 %v1551, 1.0
  %v2025 = vadd.f32 %v1553, 1.0
  %v2026 = vadd.f32 %v1555, 1.0
  %v2027 = vadd.f32 %v1557, 1.0
  %v2028 = vadd.f32 %v1559, 1.0
  %v2029 = vadd.f32 %v1561, 1.0
  %v2030 = vadd.f32 %v1563, 1.0
  %v2031 = vadd.f32 %v1565, 1.0
  %v2032 = vadd.f32 %v1567, 1.0
  %v2033 = vadd.f32 %v1569, 1.0
  %v2034 = vadd.f32 %v1571, 1.0
  %v2035 = vadd.f32 %v1573, 1.0
  %v2036 = vadd.f32 %v1575, 1.0
  %v2037 = vadd.f32 %v1577, 1.0
  %v2038 = vadd.f32 %v1579, 1.0
  %v2039 = vadd.f32 %v1581, 1.0
  %v2040 = vadd.f32 %v1583, 1.0
  %v2041 = vadd.f32 %v1585, 1.0
  %v2042 = vadd.f32 %v1587, 1.0
  %v2043 = vadd.f32 %v1589, 1.0
  %v2044 = vadd.f32 %v1591, 1.0
  %v2045 = vadd.f32 %v1593, 1.0
  %v2046 = vadd.f32 %v1595, 1.0
  %v2047 = vadd.f32 %v1597, 1.0
  %v2048 = vadd.f32 %v1599, 1.0
  %v2049 = vadd.f32 %v1601, 1.0
  %v2050 = vadd.f32 %v1603, 1.0
  %v2051 = vadd.f32 %v1605, 1.0
  %v2052 = vadd.f32 %v1607, 1.0
  %v2053 = vadd.f32 %v1609, 1.0
  %v2054 = vadd.f32 %v1611, 1.0
  %v2055 = vadd.f32 %v1613, 1.0
  %v2056 = vadd.f32 %v1615, 1.0
  %v2057 = vadd.f32 %v1617, 1.0
  %v2058 = vadd.f32 %v1619, 1.0
  %v2059 = vadd.f32 %v1621, 1.0
  %v2060 = vadd.f32 %v1623, 1.0
  %v2061 = vadd.f32 %v1625, 1.0
  %v2062 = vadd.f32 %v1627, 1.0
  %v2063 = vadd.f32 %v1629, 1.0
  %v2064 = vadd.f32 %v1631, 1.0
  %v2065 = vadd.f32 %v1633, 1.0
  %v2066 = vadd.f32 %v1635, 1.0
  %v2067 = vadd.f32 %v1637, 1.0
  %v2068 = vadd.f32 %v1639, 1.0
  %v2069 = vadd.f32 %v1641, 1.0
  %v2070 = vadd.f32 %v1643, 1.0
  %v2071 = vadd.f32 %v1645, 1.0
  %v2072 = vadd.f32 %v1647, 1.0
  %v2073 = vadd.f32 %v1649, 1.0
  %v2074 = vadd.f32 %v1651, 1.0
  %v2075 = vadd.f32 %v1653, 1.0
  %v2076 = vadd.f32 %v1655, 1.0
  %v2077 = vadd.f32 %v1657, 1.0
  %v2078 = vadd.f32 %v1659, 1.0
  %v2079 = vadd.f32 %v1661, 1.0
  %v2080 = vadd.f32 %v1663, 1.0
  %v2081 = vadd.f32 %v1665, 1.0
  %v2082 = vadd.f32 %v1667, 1.0
  %v2083 = vadd.f32 %v1669, 1.0
  %v2084 = vadd.f32 %v1671, 1.0
  %v2085 = vadd.f32 %v1673, 1.0
  %v2086 = vadd.f32 %v1675, 1.0
  %v2087 = vadd.f32 %v1677, 1.0
  %v2088 = vadd.f32 %v1679, 1.0
  %v2089 = vadd.f32 %v1681, 1.0
  %v2090 = vadd.f32 %v1683, 1.0
  %v2091 = vadd.f32 %v1685, 1.0
  %v2092 = vadd.f32 %v1687, 1.0
  %v2093 = vadd.f32 %v1689, 1.0
  %v2094 = vadd.f32 %v1691, 1.0
  %v2095 = vadd.f32 %v1693, 1.0
  %v2096 = vadd.f32 %v1695, 1.0
  %v2097 = vadd.f32 %v1697, 1.0
  %v2098 = vadd.f32 %v1699, 1.0
  %v2099 = vadd.f32 %v1701, 1.0
  %v2100 = vadd.f32 %v1703, 1.0
  %v2101 = vadd.f32 %v1705, 1.0
  %v2102 = vadd.f32 %v1707, 1.0
  %v2103 = vadd.f32 %v1709, 1.0
  %v2104 = vadd.f32 %v1711, 1.0
  %v2105 = vadd.f32 %v1713, 1.0
  %v2106 = vadd.f32 %v1715, 1.0
  %v2107 = vadd.f32 %v1717, 1.0
  %v2108 = vadd.f32 %v1719, 1.0
  %v2109 = vadd.f32 %v1721, 1.0
  %v2110 = vadd.f32 %v1723, 1.0
  %v2111 = vadd.f32 %v1725, 1.0
  %v2112 = vadd.f32 %v1727, 1.0
  %v2113 = vadd.f32 %v1729, 1.0
  %v2114 = vadd.f32 %v1731, 1.0
  %v2115 = vadd.f32 %v1733, 1.0
  %v2116 = vadd.f32 %v1735, 1.0
  %v2117 = vadd.f32 %v1737, 1.0
  %v2118 = vadd.f32 %v1739, 1.0
  %v2119 = vadd.f32 %v1741, 1.0
  %v2120 = vadd.f32 %v1743, 1.0
  %v2121 = vadd.f32 %v1745, 1.0
  %v2122 = vadd.f32 %v1747, 1.0
  %v2123 = vadd.f32 %v1749, 1.0
  %v2124 = vadd.f32 %v1751, 1.0
  %v2125 = vadd.f32 %v1753, 1.0
  %v2126 = vadd.f32 %v1755, 1.0
  %v2127 = vadd.f32 %v1757, 1.0
  %v2128 = vadd.f32 %v1759, 1.0
  %v2129 = vadd.f32 %v1761, 1.0
  %v2130 = vadd.f32 %v1763, 1.0
  %v2131 = vadd.f32 %v1765, 1.0
  %v2132 = vadd.f32 %v1767, 1.0
  %v2133 = vadd.f32 %v1769, 1.0
  %v2134 = vadd.f32 %v1771, 1.0
  %v2135 = vadd.f32 %v1773, 1.0
  %v2136 = vadd.f32 %v1775, 1.0
  %v2137 = vadd.f32 %v1777, 1.0
  %v2138 = vadd.f32 %v1779, 1.0
  %v2139 = vadd.f32 %v1781, 1.0
  %v2140 = vadd.f32 %v1783, 1.0
  %v2141 = vadd.f32 %v1785, 1.0
  %v2142 = vadd.f32 %v1787, 1.0
  %v2143 = vadd.f32 %v1789, 1.0
  %v2144 = vadd.f32 %v1791, 1.0
  %v2145 = vadd.f32 %v1793, 1.0
  %v2146 = vadd.f32 %v1795, 1.0
  %v2147 = vadd.f32 %v1797, 1.0
  %v2148 = vadd.f32 %v1799, 1.0
  %v2149 = vadd.f32 %v1801, 1.0
  %v2150 = vadd.f32 %v1803, 1.0
  %v2151 = vadd.f32 %v1805, 1.0
  %v2152 = vadd.f32 %v1807, 1.0
  %v2153 = vadd.f32 %v1809, 1.0
  %v2154 = vadd.f32 %v1811, 1.0
  %v2155 = vadd.f32 %v1813, 1.0
  %v2156 = vadd.f32 %v1815, 1.0
  %v2157 = vadd.f32 %v1817, 1.0
  %v2158 = vadd.f32 %v1819, 1.0
  %v2159 = vadd.f32 %v1821, 1.0
  %v2160 = vadd.f32 %v1823, 1.0
  %v2161 = vadd.f32 %v1825, 1.0
  %v2162 = vadd.f32 %v1827, 1.0
  %v2163 = vadd.f32 %v1829, 1.0
  %v2164 = vadd.f32 %v1831, 1.0
  %v2165 = vadd.f32 %v1833, 1.0
  %v2166 = vadd.f32 %v1835, 1.0
  %v2167 = vadd.f32 %v1837, 1.0
  %v2168 = vadd.f32 %v1839, 1.0
  %v2169 = vadd.f32 %v1841, 1.0
  %v2170 = vadd.f32 %v1843, 1.0
  %v2171 = vadd.f32 %v1845, 1.0
  %v2172 = vadd.f32 %v1847, 1.0
  %v2173 = vadd.f32 %v1849, 1.0
  %v2174 = vadd.f32 %v1851, 1.0
  %v2175 = vadd.f32 %v1853, 1.0
  %v2176 = vadd.f32 %v1855, 1.0
  %v2177 = vadd.f32 %v1857, 1.0
  %v2178 = vadd.f32 %v1859, 1.0
  %v2179 = vadd.f32 %v1861, 1.0
  %v2180 = vadd.f32 %v1863, 1.0
  %v2181 = vadd.f32 %v1865, 1.0
  %v2182 = vadd.f32 %v1867, 1.0
  %v2183 = vadd.f32 %v1869, 1.0
  %v2184 = vadd.f32 %v1871, 1.0
  %v2185 = vadd.f32 %v1873, 1.0
  %v2186 = vadd.f32 %v1875, 1.0
  %v2187 = vadd.f32 %v1877, 1.0
  %v2188 = vadd.f32 %v1879, 1.0
  %v2189 = vadd.f32 %v1881, 1.0
  %v2190 = vadd.f32 %v1883, 1.0
  %v2191 = vadd.f32 %v1885, 1.0
  %v2192 = vadd.f32 %v1887, 1.0
  %v2193 = vadd.f32 %v1889, 1.0
  %v2194 = vadd.f32 %v1891, 1.0
  %v2195 = vadd.f32 %v1893, 1.0
  %v2196 = vadd.f32 %v1895, 1.0
  %v2197 = vadd.f32 %v1897, 1.0
  %v2198 = vadd.f32 %v1899, 1.0
  %v2199 = vadd.f32 %v1901, 1.0
  %v2200 = vadd.f32 %v1903, 1.0
  %v2201 = vadd.f32 %v1905, 1.0
  %v2202 = vadd.f32 %v1907, 1.0
  %v2203 = vadd.f32 %v1909, 1.0
  %v2204 = vadd.f32 %v1911, 1.0
  %v2205 = vadd.f32 %v1913, 1.0
  %v2206 = vadd.f32 %v1915, 1.0
  %v2207 = vadd.f32 %v1917, 1.0
  %v2208 = vadd.f32 %v1919, 1.0
  %v2209 = vadd.f32 %v1921, 1.0
  %v2210 = vadd.f32 %v1923, 1.0
  %v2211 = vadd.f32 %v1925, 1.0
  %v2212 = vadd.f32 %v1927, 1.0
  %v2213 = vadd.f32 %v1929, 1.0
  %v2214 = vadd.f32 %v1931, 1.0
  %v2215 = vadd.f32 %v1933, 1.0
  %v2216 = vadd.f32 %v1935, 1.0
  %v2217 = vadd.f32 %v1937, 1.0
  %v2218 = vadd.f32 %v1939, 1.0
  %v2219 = vadd.f32 %v1941, 1.0
  %v2220 = vadd.f32 %v1943, 1.0
  %v2221 = vadd.f32 %v1945, 1.0
  %v2222 = vadd.f32 %v1947, 1.0
  %v2223 = vadd.f32 %v1949, 1.0
  %v2224 = vadd.f32 %v1951, 1.0
  %v2225 = vadd.f32 %v1953, 1.0
  %v2226 = vadd.f32 %v1955, 1.0
  %v2227 = vadd.f32 %v1957, 1.0
  %v2228 = vadd.f32 %v1959, 1.0
  %v2229 = vadd.f32 %v1961, 1.0
  %v2230 = vadd.f32 %v1963, 1.0
  %v2231 = vadd.f32 %v1965, 1.0
  %v2232 = vadd.f32 %v1967, 1.0
  %v2233 = vadd.f32 %v1969, 1.0
  %v2234 = vadd.f32 %v1971, 1.0
  %v2235 = vadd.f32 %v1973, 1.0
  %v2236 = vadd.f32 %v1975, 1.0
  %v2237 = vadd.f32 %v1977, 1.0
  %v2238 = vadd.f32 %v1979, 1.0
  %v2239 = vadd.f32 %v1981, 1.0
  %v2240 = vadd.f32 %v1983, 1.0
  %v2241 = vadd.f32 %v1985, 1.0
  %v2242 = vadd.f32 %v1987, 1.0
  %v2243 = vadd.f32 %v1989, 1.0
  %v2244 = vadd.f32 %v1991, 1.0
  %v2245 = vadd.f32 %v1993, 1.0
  %v2246 = vadd.f32 %v1995, 1.0
  %v2247 = vadd.f32 %v1997, 1.0
  %v2248 = vadd.f32 %v1999, 1.0
  %v2249 = vadd.f32 %v2001, 1.0
  %v2250 = vadd.f32 %v2003, 1.0
  %v2251 = vadd.f32 %v2005, 1.0
  %v2252 = vadd.f32 %v2007, 1.0
  %v2253 = vadd.f32 %v2009, 1.0
  %v2254 = vadd.f32 %v2011, 1.0
  %v2255 = vadd.f32 %v2013, 1.0
  %v2256 = vadd.f32 %v2015, 1.0
  %v2257 = vadd.f32 %v2017, 1.0
  %v2258 = vrcp.pop %v2018
  %v2259 = vmul.f32 1.0, %v2258
  %v2260 = vrcp.pop %v2019
  %v2261 = vmul.f32 1.0, %v2260
  %v2262 = vrcp.pop %v2020
  %v2263 = vmul.f32 1.0, %v2262
  %v2264 = vrcp.pop %v2021
  %v2265 = vmul.f32 1.0, %v2264
  %v2266 = vrcp.pop %v2022
  %v2267 = vmul.f32 1.0, %v2266
  %v2268 = vrcp.pop %v2023
  %v2269 = vmul.f32 1.0, %v2268
  %v2270 = vrcp.pop %v2024
  %v2271 = vmul.f32 1.0, %v2270
  %v2272 = vrcp.pop %v2025
  %v2273 = vmul.f32 1.0, %v2272
  %v2274 = vrcp.pop %v2026
  %v2275 = vmul.f32 1.0, %v2274
  %v2276 = vrcp.pop %v2027
  %v2277 = vmul.f32 1.0, %v2276
  %v2278 = vrcp.pop %v2028
  %v2279 = vmul.f32 1.0, %v2278
  %v2280 = vrcp.pop %v2029
  %v2281 = vmul.f32 1.0, %v2280
  %v2282 = vrcp.pop %v2030
  %v2283 = vmul.f32 1.0, %v2282
  %v2284 = vrcp.pop %v2031
  %v2285 = vmul.f32 1.0, %v2284
  %v2286 = vrcp.pop %v2032
  %v2287 = vmul.f32 1.0, %v2286
  %v2288 = vrcp.pop %v2033
  %v2289 = vmul.f32 1.0, %v2288
  %v2290 = vrcp.pop %v2034
  %v2291 = vmul.f32 1.0, %v2290
  %v2292 = vrcp.pop %v2035
  %v2293 = vmul.f32 1.0, %v2292
  %v2294 = vrcp.pop %v2036
  %v2295 = vmul.f32 1.0, %v2294
  %v2296 = vrcp.pop %v2037
  %v2297 = vmul.f32 1.0, %v2296
  %v2298 = vrcp.pop %v2038
  %v2299 = vmul.f32 1.0, %v2298
  %v2300 = vrcp.pop %v2039
  %v2301 = vmul.f32 1.0, %v2300
  %v2302 = vrcp.pop %v2040
  %v2303 = vmul.f32 1.0, %v2302
  %v2304 = vrcp.pop %v2041
  %v2305 = vmul.f32 1.0, %v2304
  %v2306 = vrcp.pop %v2042
  %v2307 = vmul.f32 1.0, %v2306
  %v2308 = vrcp.pop %v2043
  %v2309 = vmul.f32 1.0, %v2308
  %v2310 = vrcp.pop %v2044
  %v2311 = vmul.f32 1.0, %v2310
  %v2312 = vrcp.pop %v2045
  %v2313 = vmul.f32 1.0, %v2312
  %v2314 = vrcp.pop %v2046
  %v2315 = vmul.f32 1.0, %v2314
  %v2316 = vrcp.pop %v2047
  %v2317 = vmul.f32 1.0, %v2316
  %v2318 = vrcp.pop %v2048
  %v2319 = vmul.f32 1.0, %v2318
  %v2320 = vrcp.pop %v2049
  %v2321 = vmul.f32 1.0, %v2320
  %v2322 = vrcp.pop %v2050
  %v2323 = vmul.f32 1.0, %v2322
  %v2324 = vrcp.pop %v2051
  %v2325 = vmul.f32 1.0, %v2324
  %v2326 = vrcp.pop %v2052
  %v2327 = vmul.f32 1.0, %v2326
  %v2328 = vrcp.pop %v2053
  %v2329 = vmul.f32 1.0, %v2328
  %v2330 = vrcp.pop %v2054
  %v2331 = vmul.f32 1.0, %v2330
  %v2332 = vrcp.pop %v2055
  %v2333 = vmul.f32 1.0, %v2332
  %v2334 = vrcp.pop %v2056
  %v2335 = vmul.f32 1.0, %v2334
  %v2336 = vrcp.pop %v2057
  %v2337 = vmul.f32 1.0, %v2336
  %v2338 = vrcp.pop %v2058
  %v2339 = vmul.f32 1.0, %v2338
  %v2340 = vrcp.pop %v2059
  %v2341 = vmul.f32 1.0, %v2340
  %v2342 = vrcp.pop %v2060
  %v2343 = vmul.f32 1.0, %v2342
  %v2344 = vrcp.pop %v2061
  %v2345 = vmul.f32 1.0, %v2344
  %v2346 = vrcp.pop %v2062
  %v2347 = vmul.f32 1.0, %v2346
  %v2348 = vrcp.pop %v2063
  %v2349 = vmul.f32 1.0, %v2348
  %v2350 = vrcp.pop %v2064
  %v2351 = vmul.f32 1.0, %v2350
  %v2352 = vrcp.pop %v2065
  %v2353 = vmul.f32 1.0, %v2352
  %v2354 = vrcp.pop %v2066
  %v2355 = vmul.f32 1.0, %v2354
  %v2356 = vrcp.pop %v2067
  %v2357 = vmul.f32 1.0, %v2356
  %v2358 = vrcp.pop %v2068
  %v2359 = vmul.f32 1.0, %v2358
  %v2360 = vrcp.pop %v2069
  %v2361 = vmul.f32 1.0, %v2360
  %v2362 = vrcp.pop %v2070
  %v2363 = vmul.f32 1.0, %v2362
  %v2364 = vrcp.pop %v2071
  %v2365 = vmul.f32 1.0, %v2364
  %v2366 = vrcp.pop %v2072
  %v2367 = vmul.f32 1.0, %v2366
  %v2368 = vrcp.pop %v2073
  %v2369 = vmul.f32 1.0, %v2368
  %v2370 = vrcp.pop %v2074
  %v2371 = vmul.f32 1.0, %v2370
  %v2372 = vrcp.pop %v2075
  %v2373 = vmul.f32 1.0, %v2372
  %v2374 = vrcp.pop %v2076
  %v2375 = vmul.f32 1.0, %v2374
  %v2376 = vrcp.pop %v2077
  %v2377 = vmul.f32 1.0, %v2376
  %v2378 = vrcp.pop %v2078
  %v2379 = vmul.f32 1.0, %v2378
  %v2380 = vrcp.pop %v2079
  %v2381 = vmul.f32 1.0, %v2380
  %v2382 = vrcp.pop %v2080
  %v2383 = vmul.f32 1.0, %v2382
  %v2384 = vrcp.pop %v2081
  %v2385 = vmul.f32 1.0, %v2384
  %v2386 = vrcp.pop %v2082
  %v2387 = vmul.f32 1.0, %v2386
  %v2388 = vrcp.pop %v2083
  %v2389 = vmul.f32 1.0, %v2388
  %v2390 = vrcp.pop %v2084
  %v2391 = vmul.f32 1.0, %v2390
  %v2392 = vrcp.pop %v2085
  %v2393 = vmul.f32 1.0, %v2392
  %v2394 = vrcp.pop %v2086
  %v2395 = vmul.f32 1.0, %v2394
  %v2396 = vrcp.pop %v2087
  %v2397 = vmul.f32 1.0, %v2396
  %v2398 = vrcp.pop %v2088
  %v2399 = vmul.f32 1.0, %v2398
  %v2400 = vrcp.pop %v2089
  %v2401 = vmul.f32 1.0, %v2400
  %v2402 = vrcp.pop %v2090
  %v2403 = vmul.f32 1.0, %v2402
  %v2404 = vrcp.pop %v2091
  %v2405 = vmul.f32 1.0, %v2404
  %v2406 = vrcp.pop %v2092
  %v2407 = vmul.f32 1.0, %v2406
  %v2408 = vrcp.pop %v2093
  %v2409 = vmul.f32 1.0, %v2408
  %v2410 = vrcp.pop %v2094
  %v2411 = vmul.f32 1.0, %v2410
  %v2412 = vrcp.pop %v2095
  %v2413 = vmul.f32 1.0, %v2412
  %v2414 = vrcp.pop %v2096
  %v2415 = vmul.f32 1.0, %v2414
  %v2416 = vrcp.pop %v2097
  %v2417 = vmul.f32 1.0, %v2416
  %v2418 = vrcp.pop %v2098
  %v2419 = vmul.f32 1.0, %v2418
  %v2420 = vrcp.pop %v2099
  %v2421 = vmul.f32 1.0, %v2420
  %v2422 = vrcp.pop %v2100
  %v2423 = vmul.f32 1.0, %v2422
  %v2424 = vrcp.pop %v2101
  %v2425 = vmul.f32 1.0, %v2424
  %v2426 = vrcp.pop %v2102
  %v2427 = vmul.f32 1.0, %v2426
  %v2428 = vrcp.pop %v2103
  %v2429 = vmul.f32 1.0, %v2428
  %v2430 = vrcp.pop %v2104
  %v2431 = vmul.f32 1.0, %v2430
  %v2432 = vrcp.pop %v2105
  %v2433 = vmul.f32 1.0, %v2432
  %v2434 = vrcp.pop %v2106
  %v2435 = vmul.f32 1.0, %v2434
  %v2436 = vrcp.pop %v2107
  %v2437 = vmul.f32 1.0, %v2436
  %v2438 = vrcp.pop %v2108
  %v2439 = vmul.f32 1.0, %v2438
  %v2440 = vrcp.pop %v2109
  %v2441 = vmul.f32 1.0, %v2440
  %v2442 = vrcp.pop %v2110
  %v2443 = vmul.f32 1.0, %v2442
  %v2444 = vrcp.pop %v2111
  %v2445 = vmul.f32 1.0, %v2444
  %v2446 = vrcp.pop %v2112
  %v2447 = vmul.f32 1.0, %v2446
  %v2448 = vrcp.pop %v2113
  %v2449 = vmul.f32 1.0, %v2448
  %v2450 = vrcp.pop %v2114
  %v2451 = vmul.f32 1.0, %v2450
  %v2452 = vrcp.pop %v2115
  %v2453 = vmul.f32 1.0, %v2452
  %v2454 = vrcp.pop %v2116
  %v2455 = vmul.f32 1.0, %v2454
  %v2456 = vrcp.pop %v2117
  %v2457 = vmul.f32 1.0, %v2456
  %v2458 = vrcp.pop %v2118
  %v2459 = vmul.f32 1.0, %v2458
  %v2460 = vrcp.pop %v2119
  %v2461 = vmul.f32 1.0, %v2460
  %v2462 = vrcp.pop %v2120
  %v2463 = vmul.f32 1.0, %v2462
  %v2464 = vrcp.pop %v2121
  %v2465 = vmul.f32 1.0, %v2464
  %v2466 = vrcp.pop %v2122
  %v2467 = vmul.f32 1.0, %v2466
  %v2468 = vrcp.pop %v2123
  %v2469 = vmul.f32 1.0, %v2468
  %v2470 = vrcp.pop %v2124
  %v2471 = vmul.f32 1.0, %v2470
  %v2472 = vrcp.pop %v2125
  %v2473 = vmul.f32 1.0, %v2472
  %v2474 = vrcp.pop %v2126
  %v2475 = vmul.f32 1.0, %v2474
  %v2476 = vrcp.pop %v2127
  %v2477 = vmul.f32 1.0, %v2476
  %v2478 = vrcp.pop %v2128
  %v2479 = vmul.f32 1.0, %v2478
  %v2480 = vrcp.pop %v2129
  %v2481 = vmul.f32 1.0, %v2480
  %v2482 = vrcp.pop %v2130
  %v2483 = vmul.f32 1.0, %v2482
  %v2484 = vrcp.pop %v2131
  %v2485 = vmul.f32 1.0, %v2484
  %v2486 = vrcp.pop %v2132
  %v2487 = vmul.f32 1.0, %v2486
  %v2488 = vrcp.pop %v2133
  %v2489 = vmul.f32 1.0, %v2488
  %v2490 = vrcp.pop %v2134
  %v2491 = vmul.f32 1.0, %v2490
  %v2492 = vrcp.pop %v2135
  %v2493 = vmul.f32 1.0, %v2492
  %v2494 = vrcp.pop %v2136
  %v2495 = vmul.f32 1.0, %v2494
  %v2496 = vrcp.pop %v2137
  %v2497 = vmul.f32 1.0, %v2496
  %v2498 = vrcp.pop %v2138
  %v2499 = vmul.f32 1.0, %v2498
  %v2500 = vrcp.pop %v2139
  %v2501 = vmul.f32 1.0, %v2500
  %v2502 = vrcp.pop %v2140
  %v2503 = vmul.f32 1.0, %v2502
  %v2504 = vrcp.pop %v2141
  %v2505 = vmul.f32 1.0, %v2504
  %v2506 = vrcp.pop %v2142
  %v2507 = vmul.f32 1.0, %v2506
  %v2508 = vrcp.pop %v2143
  %v2509 = vmul.f32 1.0, %v2508
  %v2510 = vrcp.pop %v2144
  %v2511 = vmul.f32 1.0, %v2510
  %v2512 = vrcp.pop %v2145
  %v2513 = vmul.f32 1.0, %v2512
  %v2514 = vrcp.pop %v2146
  %v2515 = vmul.f32 1.0, %v2514
  %v2516 = vrcp.pop %v2147
  %v2517 = vmul.f32 1.0, %v2516
  %v2518 = vrcp.pop %v2148
  %v2519 = vmul.f32 1.0, %v2518
  %v2520 = vrcp.pop %v2149
  %v2521 = vmul.f32 1.0, %v2520
  %v2522 = vrcp.pop %v2150
  %v2523 = vmul.f32 1.0, %v2522
  %v2524 = vrcp.pop %v2151
  %v2525 = vmul.f32 1.0, %v2524
  %v2526 = vrcp.pop %v2152
  %v2527 = vmul.f32 1.0, %v2526
  %v2528 = vrcp.pop %v2153
  %v2529 = vmul.f32 1.0, %v2528
  %v2530 = vrcp.pop %v2154
  %v2531 = vmul.f32 1.0, %v2530
  %v2532 = vrcp.pop %v2155
  %v2533 = vmul.f32 1.0, %v2532
  %v2534 = vrcp.pop %v2156
  %v2535 = vmul.f32 1.0, %v2534
  %v2536 = vrcp.pop %v2157
  %v2537 = vmul.f32 1.0, %v2536
  %v2538 = vrcp.pop %v2158
  %v2539 = vmul.f32 1.0, %v2538
  %v2540 = vrcp.pop %v2159
  %v2541 = vmul.f32 1.0, %v2540
  %v2542 = vrcp.pop %v2160
  %v2543 = vmul.f32 1.0, %v2542
  %v2544 = vrcp.pop %v2161
  %v2545 = vmul.f32 1.0, %v2544
  %v2546 = vrcp.pop %v2162
  %v2547 = vmul.f32 1.0, %v2546
  %v2548 = vrcp.pop %v2163
  %v2549 = vmul.f32 1.0, %v2548
  %v2550 = vrcp.pop %v2164
  %v2551 = vmul.f32 1.0, %v2550
  %v2552 = vrcp.pop %v2165
  %v2553 = vmul.f32 1.0, %v2552
  %v2554 = vrcp.pop %v2166
  %v2555 = vmul.f32 1.0, %v2554
  %v2556 = vrcp.pop %v2167
  %v2557 = vmul.f32 1.0, %v2556
  %v2558 = vrcp.pop %v2168
  %v2559 = vmul.f32 1.0, %v2558
  %v2560 = vrcp.pop %v2169
  %v2561 = vmul.f32 1.0, %v2560
  %v2562 = vrcp.pop %v2170
  %v2563 = vmul.f32 1.0, %v2562
  %v2564 = vrcp.pop %v2171
  %v2565 = vmul.f32 1.0, %v2564
  %v2566 = vrcp.pop %v2172
  %v2567 = vmul.f32 1.0, %v2566
  %v2568 = vrcp.pop %v2173
  %v2569 = vmul.f32 1.0, %v2568
  %v2570 = vrcp.pop %v2174
  %v2571 = vmul.f32 1.0, %v2570
  %v2572 = vrcp.pop %v2175
  %v2573 = vmul.f32 1.0, %v2572
  %v2574 = vrcp.pop %v2176
  %v2575 = vmul.f32 1.0, %v2574
  %v2576 = vrcp.pop %v2177
  %v2577 = vmul.f32 1.0, %v2576
  %v2578 = vrcp.pop %v2178
  %v2579 = vmul.f32 1.0, %v2578
  %v2580 = vrcp.pop %v2179
  %v2581 = vmul.f32 1.0, %v2580
  %v2582 = vrcp.pop %v2180
  %v2583 = vmul.f32 1.0, %v2582
  %v2584 = vrcp.pop %v2181
  %v2585 = vmul.f32 1.0, %v2584
  %v2586 = vrcp.pop %v2182
  %v2587 = vmul.f32 1.0, %v2586
  %v2588 = vrcp.pop %v2183
  %v2589 = vmul.f32 1.0, %v2588
  %v2590 = vrcp.pop %v2184
  %v2591 = vmul.f32 1.0, %v2590
  %v2592 = vrcp.pop %v2185
  %v2593 = vmul.f32 1.0, %v2592
  %v2594 = vrcp.pop %v2186
  %v2595 = vmul.f32 1.0, %v2594
  %v2596 = vrcp.pop %v2187
  %v2597 = vmul.f32 1.0, %v2596
  %v2598 = vrcp.pop %v2188
  %v2599 = vmul.f32 1.0, %v2598
  %v2600 = vrcp.pop %v2189
  %v2601 = vmul.f32 1.0, %v2600
  %v2602 = vrcp.pop %v2190
  %v2603 = vmul.f32 1.0, %v2602
  %v2604 = vrcp.pop %v2191
  %v2605 = vmul.f32 1.0, %v2604
  %v2606 = vrcp.pop %v2192
  %v2607 = vmul.f32 1.0, %v2606
  %v2608 = vrcp.pop %v2193
  %v2609 = vmul.f32 1.0, %v2608
  %v2610 = vrcp.pop %v2194
  %v2611 = vmul.f32 1.0, %v2610
  %v2612 = vrcp.pop %v2195
  %v2613 = vmul.f32 1.0, %v2612
  %v2614 = vrcp.pop %v2196
  %v2615 = vmul.f32 1.0, %v2614
  %v2616 = vrcp.pop %v2197
  %v2617 = vmul.f32 1.0, %v2616
  %v2618 = vrcp.pop %v2198
  %v2619 = vmul.f32 1.0, %v2618
  %v2620 = vrcp.pop %v2199
  %v2621 = vmul.f32 1.0, %v2620
  %v2622 = vrcp.pop %v2200
  %v2623 = vmul.f32 1.0, %v2622
  %v2624 = vrcp.pop %v2201
  %v2625 = vmul.f32 1.0, %v2624
  %v2626 = vrcp.pop %v2202
  %v2627 = vmul.f32 1.0, %v2626
  %v2628 = vrcp.pop %v2203
  %v2629 = vmul.f32 1.0, %v2628
  %v2630 = vrcp.pop %v2204
  %v2631 = vmul.f32 1.0, %v2630
  %v2632 = vrcp.pop %v2205
  %v2633 = vmul.f32 1.0, %v2632
  %v2634 = vrcp.pop %v2206
  %v2635 = vmul.f32 1.0, %v2634
  %v2636 = vrcp.pop %v2207
  %v2637 = vmul.f32 1.0, %v2636
  %v2638 = vrcp.pop %v2208
  %v2639 = vmul.f32 1.0, %v2638
  %v2640 = vrcp.pop %v2209
  %v2641 = vmul.f32 1.0, %v2640
  %v2642 = vrcp.pop %v2210
  %v2643 = vmul.f32 1.0, %v2642
  %v2644 = vrcp.pop %v2211
  %v2645 = vmul.f32 1.0, %v2644
  %v2646 = vrcp.pop %v2212
  %v2647 = vmul.f32 1.0, %v2646
  %v2648 = vrcp.pop %v2213
  %v2649 = vmul.f32 1.0, %v2648
  %v2650 = vrcp.pop %v2214
  %v2651 = vmul.f32 1.0, %v2650
  %v2652 = vrcp.pop %v2215
  %v2653 = vmul.f32 1.0, %v2652
  %v2654 = vrcp.pop %v2216
  %v2655 = vmul.f32 1.0, %v2654
  %v2656 = vrcp.pop %v2217
  %v2657 = vmul.f32 1.0, %v2656
  %v2658 = vrcp.pop %v2218
  %v2659 = vmul.f32 1.0, %v2658
  %v2660 = vrcp.pop %v2219
  %v2661 = vmul.f32 1.0, %v2660
  %v2662 = vrcp.pop %v2220
  %v2663 = vmul.f32 1.0, %v2662
  %v2664 = vrcp.pop %v2221
  %v2665 = vmul.f32 1.0, %v2664
  %v2666 = vrcp.pop %v2222
  %v2667 = vmul.f32 1.0, %v2666
  %v2668 = vrcp.pop %v2223
  %v2669 = vmul.f32 1.0, %v2668
  %v2670 = vrcp.pop %v2224
  %v2671 = vmul.f32 1.0, %v2670
  %v2672 = vrcp.pop %v2225
  %v2673 = vmul.f32 1.0, %v2672
  %v2674 = vrcp.pop %v2226
  %v2675 = vmul.f32 1.0, %v2674
  %v2676 = vrcp.pop %v2227
  %v2677 = vmul.f32 1.0, %v2676
  %v2678 = vrcp.pop %v2228
  %v2679 = vmul.f32 1.0, %v2678
  %v2680 = vrcp.pop %v2229
  %v2681 = vmul.f32 1.0, %v2680
  %v2682 = vrcp.pop %v2230
  %v2683 = vmul.f32 1.0, %v2682
  %v2684 = vrcp.pop %v2231
  %v2685 = vmul.f32 1.0, %v2684
  %v2686 = vrcp.pop %v2232
  %v2687 = vmul.f32 1.0, %v2686
  %v2688 = vrcp.pop %v2233
  %v2689 = vmul.f32 1.0, %v2688
  %v2690 = vrcp.pop %v2234
  %v2691 = vmul.f32 1.0, %v2690
  %v2692 = vrcp.pop %v2235
  %v2693 = vmul.f32 1.0, %v2692
  %v2694 = vrcp.pop %v2236
  %v2695 = vmul.f32 1.0, %v2694
  %v2696 = vrcp.pop %v2237
  %v2697 = vmul.f32 1.0, %v2696
  %v2698 = vrcp.pop %v2238
  %v2699 = vmul.f32 1.0, %v2698
  %v2700 = vrcp.pop %v2239
  %v2701 = vmul.f32 1.0, %v2700
  %v2702 = vrcp.pop %v2240
  %v2703 = vmul.f32 1.0, %v2702
  %v2704 = vrcp.pop %v2241
  %v2705 = vmul.f32 1.0, %v2704
  %v2706 = vrcp.pop %v2242
  %v2707 = vmul.f32 1.0, %v2706
  %v2708 = vrcp.pop %v2243
  %v2709 = vmul.f32 1.0, %v2708
  %v2710 = vrcp.pop %v2244
  %v2711 = vmul.f32 1.0, %v2710
  %v2712 = vrcp.pop %v2245
  %v2713 = vmul.f32 1.0, %v2712
  %v2714 = vrcp.pop %v2246
  %v2715 = vmul.f32 1.0, %v2714
  %v2716 = vrcp.pop %v2247
  %v2717 = vmul.f32 1.0, %v2716
  %v2718 = vrcp.pop %v2248
  %v2719 = vmul.f32 1.0, %v2718
  %v2720 = vrcp.pop %v2249
  %v2721 = vmul.f32 1.0, %v2720
  %v2722 = vrcp.pop %v2250
  %v2723 = vmul.f32 1.0, %v2722
  %v2724 = vrcp.pop %v2251
  %v2725 = vmul.f32 1.0, %v2724
  %v2726 = vrcp.pop %v2252
  %v2727 = vmul.f32 1.0, %v2726
  %v2728 = vrcp.pop %v2253
  %v2729 = vmul.f32 1.0, %v2728
  %v2730 = vrcp.pop %v2254
  %v2731 = vmul.f32 1.0, %v2730
  %v2732 = vrcp.pop %v2255
  %v2733 = vmul.f32 1.0, %v2732
  %v2734 = vrcp.pop %v2256
  %v2735 = vmul.f32 1.0, %v2734
  %v2736 = vrcp.pop %v2257
  %v2737 = vmul.f32 1.0, %v2736
  %v2738 = vld [vmem:[%s2] sm:$0xff]
  %v2739 = vld [vmem:[%s2 + $0x8] sm:$0xff]
  %v2740 = vld [vmem:[%s3] sm:$0x3]
  %2742 = vset.pattern.permute.xlu0 0
  %2743 = vperm.xlu0 %2742, %v2740
  %v2744 = vpop.permute.xlu0 %2743
  %v2748 = vcombine.high %v2738, %v2738
  %v2750 = vunpack.c.l.s4 1983009808
  %v2751 = vunpack.c.0.s8 %v2750
  %v2752 = vlaneseq
  %v2753 = vshrl.u32 %v2752, 7
  %v2754 = vsub.s32 %v2751, %v2753
  %v2755 = vrot.slane %v2738, %v2754
  %v2757 = vunpack.c.l.s4 1983009808
  %v2758 = vunpack.c.0.s8 %v2757
  %v2759 = vlaneseq
  %v2760 = vshrl.u32 %v2759, 7
  %v2761 = vsub.s32 %v2758, %v2760
  %v2762 = vrot.slane %v2748, %v2761
  %v2763 = vcombine.high %v2755, %v2755
  %v2764 = vcombine.high %v2762, %v2762
  %v2765 = vcombine.high %v2739, %v2739
  %v2767 = vunpack.c.l.s4 1983009808
  %v2768 = vunpack.c.0.s8 %v2767
  %v2769 = vlaneseq
  %v2770 = vshrl.u32 %v2769, 7
  %v2771 = vsub.s32 %v2768, %v2770
  %v2772 = vrot.slane %v2739, %v2771
  %v2774 = vunpack.c.l.s4 1983009808
  %v2775 = vunpack.c.0.s8 %v2774
  %v2776 = vlaneseq
  %v2777 = vshrl.u32 %v2776, 7
  %v2778 = vsub.s32 %v2775, %v2777
  %v2779 = vrot.slane %v2765, %v2778
  %v2780 = vcombine.high %v2772, %v2772
  %v2781 = vcombine.high %v2779, %v2779
  %vm2789 = vcmask 523264
  %v2790 = vsel %vm2789, %v2781, 0
  %2792 = vmatprep.subr.mxu0 %v2321
  %2793 = vmatpush1.msra.mxu0 %v2319
  %2794 = vmatprep.subr.mxu0 %v2317
  %2795 = vmatpush1.msra.mxu0 %v2315
  %2796 = vmatprep.subr.mxu0 %v2313
  %2797 = vmatpush1.msra.mxu0 %v2311
  %2798 = vmatprep.subr.mxu0 %v2309
  %2799 = vmatpush1.msra.mxu0 %v2307
  %2800 = vmatprep.subr.mxu0 %v2305
  %2801 = vmatpush1.msra.mxu0 %v2303
  %2802 = vmatprep.subr.mxu0 %v2301
  %2803 = vmatpush1.msra.mxu0 %v2299
  %2804 = vmatprep.subr.mxu0 %v2297
  %2805 = vmatpush1.msra.mxu0 %v2295
  %2806 = vmatprep.subr.mxu0 %v2293
  %2807 = vmatpush1.msra.mxu0 %v2291
  %2808 = vmatprep.subr.mxu0 %v2289
  %2809 = vmatpush1.msra.mxu0 %v2287
  %2810 = vmatprep.subr.mxu0 %v2285
  %2811 = vmatpush1.msra.mxu0 %v2283
  %2812 = vmatprep.subr.mxu0 %v2281
  %2813 = vmatpush1.msra.mxu0 %v2279
  %2814 = vmatprep.subr.mxu0 %v2277
  %2815 = vmatpush1.msra.mxu0 %v2275
  %2816 = vmatprep.subr.mxu0 %v2273
  %2817 = vmatpush1.msra.mxu0 %v2271
  %2818 = vmatprep.subr.mxu0 %v2269
  %2819 = vmatpush1.msra.mxu0 %v2267
  %2820 = vmatprep.subr.mxu0 %v2265
  %2821 = vmatpush1.msra.mxu0 %v2263
  %2822 = vmatprep.subr.mxu0 %v2261
  %2823 = vmatpush1.msra.mxu0 %v2259
  %2824 = vmatprep.subr.mxu0 %v2385
  %2825 = vmatpush2.msra.mxu0 %v2383
  %2826 = vmatprep.subr.mxu0 %v2381
  %2827 = vmatpush2.msra.mxu0 %v2379
  %2828 = vmatprep.subr.mxu0 %v2377
  %2829 = vmatpush2.msra.mxu0 %v2375
  %2830 = vmatprep.subr.mxu0 %v2373
  %2831 = vmatpush2.msra.mxu0 %v2371
  %2832 = vmatprep.subr.mxu0 %v2369
  %2833 = vmatpush2.msra.mxu0 %v2367
  %2834 = vmatprep.subr.mxu0 %v2365
  %2835 = vmatpush2.msra.mxu0 %v2363
  %2836 = vmatprep.subr.mxu0 %v2361
  %2837 = vmatpush2.msra.mxu0 %v2359
  %2838 = vmatprep.subr.mxu0 %v2357
  %2839 = vmatpush2.msra.mxu0 %v2355
  %2840 = vmatprep.subr.mxu0 %v2353
  %2841 = vmatpush2.msra.mxu0 %v2351
  %2842 = vmatprep.subr.mxu0 %v2349
  %2843 = vmatpush2.msra.mxu0 %v2347
  %2844 = vmatprep.subr.mxu0 %v2345
  %2845 = vmatpush2.msra.mxu0 %v2343
  %2846 = vmatprep.subr.mxu0 %v2341
  %2847 = vmatpush2.msra.mxu0 %v2339
  %2848 = vmatprep.subr.mxu0 %v2337
  %2849 = vmatpush2.msra.mxu0 %v2335
  %2850 = vmatprep.subr.mxu0 %v2333
  %2851 = vmatpush2.msra.mxu0 %v2331
  %2852 = vmatprep.subr.mxu0 %v2329
  %2853 = vmatpush2.msra.mxu0 %v2327
  %2854 = vmatprep.subr.mxu0 %v2325
  %2855 = vmatpush2.msra.mxu0 %v2323
  %2856 = vmatprep.mubr.f32.mxu0 %v2763
  %2857 = vmatmul.mubr.f32.gmra.mxu0 %v2755
  %v2858 = vpop.f32.mrf.mxu0
  %v2859 = vadd.f32 %v2744, %v2858
  %v2860 = vpop.f32.mrf.mxu0
  %v2861 = vadd.f32 %v2744, %v2860
  %2862 = vdwg.mxu0
  %2863 = vmatprep.subr.mxu0 %v2449
  %2864 = vmatpush1.msra.mxu0 %v2447
  %2865 = vmatprep.subr.mxu0 %v2445
  %2866 = vmatpush1.msra.mxu0 %v2443
  %2867 = vmatprep.subr.mxu0 %v2441
  %2868 = vmatpush1.msra.mxu0 %v2439
  %2869 = vmatprep.subr.mxu0 %v2437
  %2870 = vmatpush1.msra.mxu0 %v2435
  %2871 = vmatprep.subr.mxu0 %v2433
  %2872 = vmatpush1.msra.mxu0 %v2431
  %2873 = vmatprep.subr.mxu0 %v2429
  %2874 = vmatpush1.msra.mxu0 %v2427
  %2875 = vmatprep.subr.mxu0 %v2425
  %2876 = vmatpush1.msra.mxu0 %v2423
  %2877 = vmatprep.subr.mxu0 %v2421
  %2878 = vmatpush1.msra.mxu0 %v2419
  %2879 = vmatprep.subr.mxu0 %v2417
  %2880 = vmatpush1.msra.mxu0 %v2415
  %2881 = vmatprep.subr.mxu0 %v2413
  %2882 = vmatpush1.msra.mxu0 %v2411
  %2883 = vmatprep.subr.mxu0 %v2409
  %2884 = vmatpush1.msra.mxu0 %v2407
  %2885 = vmatprep.subr.mxu0 %v2405
  %2886 = vmatpush1.msra.mxu0 %v2403
  %2887 = vmatprep.subr.mxu0 %v2401
  %2888 = vmatpush1.msra.mxu0 %v2399
  %2889 = vmatprep.subr.mxu0 %v2397
  %2890 = vmatpush1.msra.mxu0 %v2395
  %2891 = vmatprep.subr.mxu0 %v2393
  %2892 = vmatpush1.msra.mxu0 %v2391
  %2893 = vmatprep.subr.mxu0 %v2389
  %2894 = vmatpush1.msra.mxu0 %v2387
  %2895 = vmatprep.subr.mxu0 %v2513
  %2896 = vmatpush2.msra.mxu0 %v2511
  %2897 = vmatprep.subr.mxu0 %v2509
  %2898 = vmatpush2.msra.mxu0 %v2507
  %2899 = vmatprep.subr.mxu0 %v2505
  %2900 = vmatpush2.msra.mxu0 %v2503
  %2901 = vmatprep.subr.mxu0 %v2501
  %2902 = vmatpush2.msra.mxu0 %v2499
  %2903 = vmatprep.subr.mxu0 %v2497
  %2904 = vmatpush2.msra.mxu0 %v2495
  %2905 = vmatprep.subr.mxu0 %v2493
  %2906 = vmatpush2.msra.mxu0 %v2491
  %2907 = vmatprep.subr.mxu0 %v2489
  %2908 = vmatpush2.msra.mxu0 %v2487
  %2909 = vmatprep.subr.mxu0 %v2485
  %2910 = vmatpush2.msra.mxu0 %v2483
  %2911 = vmatprep.subr.mxu0 %v2481
  %2912 = vmatpush2.msra.mxu0 %v2479
  %2913 = vmatprep.subr.mxu0 %v2477
  %2914 = vmatpush2.msra.mxu0 %v2475
  %2915 = vmatprep.subr.mxu0 %v2473
  %2916 = vmatpush2.msra.mxu0 %v2471
  %2917 = vmatprep.subr.mxu0 %v2469
  %2918 = vmatpush2.msra.mxu0 %v2467
  %2919 = vmatprep.subr.mxu0 %v2465
  %2920 = vmatpush2.msra.mxu0 %v2463
  %2921 = vmatprep.subr.mxu0 %v2461
  %2922 = vmatpush2.msra.mxu0 %v2459
  %2923 = vmatprep.subr.mxu0 %v2457
  %2924 = vmatpush2.msra.mxu0 %v2455
  %2925 = vmatprep.subr.mxu0 %v2453
  %2926 = vmatpush2.msra.mxu0 %v2451
  %2927 = vmatprep.mubr.f32.mxu0 %v2764
  %2928 = vmatmul.mubr.f32.gmra.mxu0 %v2762
  %v2929 = vpop.f32.mrf.mxu0
  %v2930 = vadd.f32 %v2859, %v2929
  %v2931 = vpop.f32.mrf.mxu0
  %v2932 = vadd.f32 %v2861, %v2931
  %2933 = vdwg.mxu0
  %2934 = vmatprep.subr.mxu0 %v2577
  %2935 = vmatpush1.msra.mxu0 %v2575
  %2936 = vmatprep.subr.mxu0 %v2573
  %2937 = vmatpush1.msra.mxu0 %v2571
  %2938 = vmatprep.subr.mxu0 %v2569
  %2939 = vmatpush1.msra.mxu0 %v2567
  %2940 = vmatprep.subr.mxu0 %v2565
  %2941 = vmatpush1.msra.mxu0 %v2563
  %2942 = vmatprep.subr.mxu0 %v2561
  %2943 = vmatpush1.msra.mxu0 %v2559
  %2944 = vmatprep.subr.mxu0 %v2557
  %2945 = vmatpush1.msra.mxu0 %v2555
  %2946 = vmatprep.subr.mxu0 %v2553
  %2947 = vmatpush1.msra.mxu0 %v2551
  %2948 = vmatprep.subr.mxu0 %v2549
  %2949 = vmatpush1.msra.mxu0 %v2547
  %2950 = vmatprep.subr.mxu0 %v2545
  %2951 = vmatpush1.msra.mxu0 %v2543
  %2952 = vmatprep.subr.mxu0 %v2541
  %2953 = vmatpush1.msra.mxu0 %v2539
  %2954 = vmatprep.subr.mxu0 %v2537
  %2955 = vmatpush1.msra.mxu0 %v2535
  %2956 = vmatprep.subr.mxu0 %v2533
  %2957 = vmatpush1.msra.mxu0 %v2531
  %2958 = vmatprep.subr.mxu0 %v2529
  %2959 = vmatpush1.msra.mxu0 %v2527
  %2960 = vmatprep.subr.mxu0 %v2525
  %2961 = vmatpush1.msra.mxu0 %v2523
  %2962 = vmatprep.subr.mxu0 %v2521
  %2963 = vmatpush1.msra.mxu0 %v2519
  %2964 = vmatprep.subr.mxu0 %v2517
  %2965 = vmatpush1.msra.mxu0 %v2515
  %2966 = vmatprep.subr.mxu0 %v2641
  %2967 = vmatpush2.msra.mxu0 %v2639
  %2968 = vmatprep.subr.mxu0 %v2637
  %2969 = vmatpush2.msra.mxu0 %v2635
  %2970 = vmatprep.subr.mxu0 %v2633
  %2971 = vmatpush2.msra.mxu0 %v2631
  %2972 = vmatprep.subr.mxu0 %v2629
  %2973 = vmatpush2.msra.mxu0 %v2627
  %2974 = vmatprep.subr.mxu0 %v2625
  %2975 = vmatpush2.msra.mxu0 %v2623
  %2976 = vmatprep.subr.mxu0 %v2621
  %2977 = vmatpush2.msra.mxu0 %v2619
  %2978 = vmatprep.subr.mxu0 %v2617
  %2979 = vmatpush2.msra.mxu0 %v2615
  %2980 = vmatprep.subr.mxu0 %v2613
  %2981 = vmatpush2.msra.mxu0 %v2611
  %2982 = vmatprep.subr.mxu0 %v2609
  %2983 = vmatpush2.msra.mxu0 %v2607
  %2984 = vmatprep.subr.mxu0 %v2605
  %2985 = vmatpush2.msra.mxu0 %v2603
  %2986 = vmatprep.subr.mxu0 %v2601
  %2987 = vmatpush2.msra.mxu0 %v2599
  %2988 = vmatprep.subr.mxu0 %v2597
  %2989 = vmatpush2.msra.mxu0 %v2595
  %2990 = vmatprep.subr.mxu0 %v2593
  %2991 = vmatpush2.msra.mxu0 %v2591
  %2992 = vmatprep.subr.mxu0 %v2589
  %2993 = vmatpush2.msra.mxu0 %v2587
  %2994 = vmatprep.subr.mxu0 %v2585
  %2995 = vmatpush2.msra.mxu0 %v2583
  %2996 = vmatprep.subr.mxu0 %v2581
  %2997 = vmatpush2.msra.mxu0 %v2579
  %2998 = vmatprep.mubr.f32.mxu0 %v2780
  %2999 = vmatmul.mubr.f32.gmra.mxu0 %v2772
  %v3000 = vpop.f32.mrf.mxu0
  %v3001 = vadd.f32 %v2930, %v3000
  %v3002 = vpop.f32.mrf.mxu0
  %v3003 = vadd.f32 %v2932, %v3002
  %3004 = vdwg.mxu0
  %3005 = vmatprep.subr.mxu0 %v2705
  %3006 = vmatpush1.msra.mxu0 %v2703
  %3007 = vmatprep.subr.mxu0 %v2701
  %3008 = vmatpush1.msra.mxu0 %v2699
  %3009 = vmatprep.subr.mxu0 %v2697
  %3010 = vmatpush1.msra.mxu0 %v2695
  %3011 = vmatprep.subr.mxu0 %v2693
  %3012 = vmatpush1.msra.mxu0 %v2691
  %3013 = vmatprep.subr.mxu0 %v2689
  %3014 = vmatpush1.msra.mxu0 %v2687
  %3015 = vmatprep.subr.mxu0 %v2685
  %3016 = vmatpush1.msra.mxu0 %v2683
  %3017 = vmatprep.subr.mxu0 %v2681
  %3018 = vmatpush1.msra.mxu0 %v2679
  %3019 = vmatprep.subr.mxu0 %v2677
  %3020 = vmatpush1.msra.mxu0 %v2675
  %3021 = vmatprep.subr.mxu0 %v2673
  %3022 = vmatpush1.msra.mxu0 %v2671
  %3023 = vmatprep.subr.mxu0 %v2669
  %3024 = vmatpush1.msra.mxu0 %v2667
  %3025 = vmatprep.subr.mxu0 %v2665
  %3026 = vmatpush1.msra.mxu0 %v2663
  %3027 = vmatprep.subr.mxu0 %v2661
  %3028 = vmatpush1.msra.mxu0 %v2659
  %3029 = vmatprep.subr.mxu0 %v2657
  %3030 = vmatpush1.msra.mxu0 %v2655
  %3031 = vmatprep.subr.mxu0 %v2653
  %3032 = vmatpush1.msra.mxu0 %v2651
  %3033 = vmatprep.subr.mxu0 %v2649
  %3034 = vmatpush1.msra.mxu0 %v2647
  %3035 = vmatprep.subr.mxu0 %v2645
  %3036 = vmatpush1.msra.mxu0 %v2643
  %3037 = vmatprep.subr.mxu0 0.0
  %3038 = vmatpush2.msra.mxu0 0.0
  %3039 = vmatprep.subr.mxu0 0.0
  %3040 = vmatpush2.msra.mxu0 0.0
  %3041 = vmatprep.subr.mxu0 0.0
  %3042 = vmatpush2.msra.mxu0 0.0
  %3043 = vmatprep.subr.mxu0 0.0
  %3044 = vmatpush2.msra.mxu0 0.0
  %3045 = vmatprep.subr.mxu0 0.0
  %3046 = vmatpush2.msra.mxu0 0.0
  %3047 = vmatprep.subr.mxu0 0.0
  %3048 = vmatpush2.msra.mxu0 0.0
  %3049 = vmatprep.subr.mxu0 0.0
  %3050 = vmatpush2.msra.mxu0 0.0
  %3051 = vmatprep.subr.mxu0 0.0
  %3052 = vmatpush2.msra.mxu0 0.0
  %3053 = vmatprep.subr.mxu0 %v2737
  %3054 = vmatpush2.msra.mxu0 %v2735
  %3055 = vmatprep.subr.mxu0 %v2733
  %3056 = vmatpush2.msra.mxu0 %v2731
  %3057 = vmatprep.subr.mxu0 %v2729
  %3058 = vmatpush2.msra.mxu0 %v2727
  %3059 = vmatprep.subr.mxu0 %v2725
  %3060 = vmatpush2.msra.mxu0 %v2723
  %3061 = vmatprep.subr.mxu0 %v2721
  %3062 = vmatpush2.msra.mxu0 %v2719
  %3063 = vmatprep.subr.mxu0 %v2717
  %3064 = vmatpush2.msra.mxu0 %v2715
  %3065 = vmatprep.subr.mxu0 %v2713
  %3066 = vmatpush2.msra.mxu0 %v2711
  %3067 = vmatprep.subr.mxu0 %v2709
  %3068 = vmatpush2.msra.mxu0 %v2707
  %3069 = vmatprep.mubr.f32.mxu0 %v2790
  %3070 = vmatmul.mubr.f32.gmra.mxu0 %v2779
  %v3071 = vpop.f32.mrf.mxu0
  %v3072 = vadd.f32 %v3001, %v3071
  %v3073 = vpop.f32.mrf.mxu0
  %v3074 = vadd.f32 %v3003, %v3073
  %3075 = vdwg.mxu0
  %v3076 = vxor.u32 %v3072, 2147483648
  %v3077 = vxor.u32 %v3074, 2147483648
  %v3078 = vmul.f32 %v3076, 1.442695
  %v3079 = vpow.pop %v3078
  %v3080 = vmul.f32 %v3077, 1.442695
  %v3081 = vpow.pop %v3080
  %v3082 = vadd.f32 %v3079, 1.0
  %v3083 = vadd.f32 %v3081, 1.0
  %v3084 = vrcp.pop %v3082
  %v3085 = vmul.f32 1.0, %v3084
  %v3086 = vrcp.pop %v3083
  %v3087 = vmul.f32 1.0, %v3086
  %v3090 = vrot.slane %v3085, 7
  %v3091 = vrot.slane %v3087, 7
  %v3094 = vsub.f32 %v3085, %v3090
  %v3095 = vsub.f32 %v3087, %v3091
  %v3096 = vmax.f32 %v3094, 0.0
  %v3097 = vmax.f32 %v3095, 0.0
  %v3098 = vand.u32 2147483647, %v3094
  %v3099 = vand.u32 2147483647, %v3095
  %v3100 = vsub.f32 0.0, %v3098
  %v3101 = vsub.f32 0.0, %v3099
  %v3102 = vmul.f32 %v3100, 1.442695
  %v3103 = vpow.pop %v3102
  %v3104 = vmul.f32 %v3101, 1.442695
  %v3105 = vpow.pop %v3104
  %v3106 = vadd.f32 %v3103, 1.0
  %v3107 = vadd.f32 %v3105, 1.0
  %v3108 = vlog2.pop %v3106
  %v3109 = vmul.f32 %v3108, 0.6931472
  %v3110 = vlog2.pop %v3107
  %v3111 = vmul.f32 %v3110, 0.6931472
  %v3112 = vadd.f32 %v3096, %v3109
  %v3113 = vadd.f32 %v3097, %v3111
  %v3114 = vsub.f32 0.0, %v3112
  %v3115 = vsub.f32 0.0, %v3113
  %v3118 = vcombine.low %v3114, %v3115
  %v3120 = vunpack.c.l.s4 1966171168
  %v3121 = vunpack.c.0.s8 %v3120
  %v3122 = vlaneseq
  %v3123 = vshrl.u32 %v3122, 7
  %v3124 = vsub.s32 %v3121, %v3123
  %v3125 = vrot.slane %v3118, %v3124
  %v3126 = vcombine.high %v3125, %v3125
  %v3128 = vunpack.c.l.s4 1966171168
  %v3129 = vunpack.c.0.s8 %v3128
  %v3130 = vlaneseq
  %v3131 = vshrl.u32 %v3130, 7
  %v3132 = vsub.s32 %v3129, %v3131
  %v3133 = vrot.slane %v3126, %v3132
  %v3135 = vlaneseq
  %vm3136 = vcmp.ge.s32.totalorder %v3135, 0
  %vm3137 = vcmp.lt.s32.totalorder %v3135, 256
  %vm3138 = vmand %vm3136, %vm3137
  %3139 = vst.msk [vmem:[%s4] ss:$2 sm:$0x3] %vm3138, %v3133
  %v3140 = vsub.f32 %v3094, %v3112
  %v3141 = vsub.f32 %v3095, %v3113
  %v3144 = vcombine.low %v3140, %v3141
  %v3146 = vunpack.c.l.s4 1966171168
  %v3147 = vunpack.c.0.s8 %v3146
  %v3148 = vlaneseq
  %v3149 = vshrl.u32 %v3148, 7
  %v3150 = vsub.s32 %v3147, %v3149
  %v3151 = vrot.slane %v3144, %v3150
  %v3152 = vcombine.high %v3151, %v3151
  %v3154 = vunpack.c.l.s4 1966171168
  %v3155 = vunpack.c.0.s8 %v3154
  %v3156 = vlaneseq
  %v3157 = vshrl.u32 %v3156, 7
  %v3158 = vsub.s32 %v3155, %v3157
  %v3159 = vrot.slane %v3152, %v3158
  %s3161 = scalar_lea.vmem %s4, 1
  %3162 = vst.msk [vmem:[%s3161] ss:$2 sm:$0x3] %vm3138, %v3159
  // Predicated region
  $region18: #{cnn_forward.1} parent=0 // pred_check
    _
  $region19: #{cnn_forward.1} parent=0 // pred_check_branch
    %3164 = sbr.rel (0) target = $region21
  $region20: #{cnn_forward.1} parent=0 // pred_region
    _
  $region21: #{cnn_forward.1} parent=0 // pred_fallthru
    _
  // Predicated region
  $region22: #{cnn_forward.1} parent=0 // pred_check
    _
  $region23: #{cnn_forward.1} parent=0 // pred_check_branch
    %3166 = sbr.rel (0) target = $region25
  $region24: #{cnn_forward.1} parent=0 // pred_region
    _
  $region25: #{cnn_forward.1} parent=0 // pred_fallthru
    _

</llo_original>
